<compile_context>
chip_gen: v7x
topology: tpu7x:2x2x1
jax: 0.10.0
libtpu: 0.0.40
codegen_flags: <defaults>
</compile_context>

<pallas_src>
import math
import numpy as np
import jax
import jax.numpy as jnp
from jax import lax
from jax.experimental import pallas as pl
from jax.experimental.pallas import tpu as pltpu

# ---- model config (small, consistent with the module) ----
B, T, C = 2, 16, 32          # batch, seq len, encoder_embed_dim
HEADS = 4                    # encoder_attention_heads
DH = C // HEADS              # head dim
FFN = 64                     # encoder_ffn_embed_dim
LAYERS = 2                   # encoder_layers
CONV_POS = 8                 # conv_pos (even kernel -> SamePad trims last step)
CONV_GROUPS = 4              # conv_pos_groups
PAD = CONV_POS // 2
EPS = 1e-5                   # LayerNorm eps (PyTorch default)

BT = B * T                   # tokens = 32
HBT = HEADS * BT             # stacked (head, token) rows = 128 -> lane-dense
KC = CONV_POS * C            # im2col contraction depth = 256

MM_DTYPE = jnp.bfloat16      # MXU operand dtype; accumulation stays f32
NEG_BIG = -1e30


def _gelu_exact(x):
    # nn.GELU() default is the exact erf formulation (kept for parity).
    return 0.5 * x * (1.0 + lax.erf(x * (1.0 / math.sqrt(2.0))))


def _layernorm(y, g, b):
    # One-pass stats: sum(y) and sum(y*y) have no data dependence, so the two
    # lane reductions can issue concurrently on the XLU.
    mu = jnp.mean(y, axis=-1, keepdims=True)
    ms = jnp.mean(y * y, axis=-1, keepdims=True)
    var = jnp.maximum(ms - mu * mu, 0.0)
    return (y - mu) * lax.rsqrt(var + EPS) * g + b


# ------------------------------------------------------------------
# Precomputed constant masks (passed to the kernel as small VMEM inputs)
# ------------------------------------------------------------------
def _build_masks():
    rows = np.arange(HBT)
    head_of_row = rows // BT                     # head index of stacked row
    head_of_chan = np.arange(C) // DH            # head index of channel
    # stack_mask[(h, t'), c] = 1 if head h owns channel c        -> bf16 {0,1}
    stack_mask = (head_of_row[:, None] == head_of_chan[None, :]).astype(np.float32)
    # spread[h, j] = 1 if key column j belongs to head h          -> f32 {0,1}
    spread = (np.arange(HEADS)[:, None] == head_of_row[None, :]).astype(np.float32)
    # additive batch bias: 0 if query row and key column share a batch,
    # else -1e30 (no cross-batch attention)
    q_batch = np.arange(BT) // T
    k_batch = (rows % BT) // T
    attn_bias = np.where(q_batch[:, None] == k_batch[None, :],
                         0.0, NEG_BIG).astype(np.float32)
    return (jnp.asarray(stack_mask, dtype=MM_DTYPE),      # (HBT, C)  bf16
            jnp.asarray(attn_bias, dtype=jnp.float32),    # (BT, HBT) f32
            jnp.asarray(spread, dtype=jnp.float32))       # (HEADS, HBT) f32


_STACK_MASK, _ATTN_BIAS, _SPREAD = _build_masks()


# ------------------------------------------------------------------
# Single fused kernel: pos_conv + GELU + residual + LN, then
# LAYERS x (MHA -> +res -> LN -> ReLU FFN -> +res -> LN)
# ------------------------------------------------------------------
def encoder_kernel(x_ref, xcol_ref, wconv_ref, cb_ref, g0_ref, b0_ref,
                   stack_mask_ref, bias_ref, spread_ref,
                   wqkv_ref, bqkv_ref, wo_ref, bo_ref, g1_ref, b1_ref,
                   w1_ref, fb1_ref, w2_ref, fb2_ref, g2_ref, b2_ref,
                   o_ref):
    f32 = jnp.float32

    stack_mask = stack_mask_ref[...]          # (HBT, C)  bf16 {0,1}
    attn_bias = bias_ref[...]                 # (BT, HBT) f32  {0, -1e30}
    spread = spread_ref[...]                  # (HEADS, HBT) f32 {0,1}

    # ---- pos_conv (im2col'd grouped conv, weight-normed) + GELU + res + LN ----
    x = x_ref[...].astype(f32)                                    # (BT, C)
    conv = jnp.dot(xcol_ref[...], wconv_ref[...],
                   preferred_element_type=f32)                    # bf16 x bf16
    conv = _gelu_exact(conv + cb_ref[...])
    y = _layernorm(x + conv, g0_ref[...], b0_ref[...])

    # ---- transformer layers (post-LN variant) ----
    for l in range(LAYERS):
        # fused QKV projection (attention scale pre-folded into Wq / bq)
        qkv = jnp.dot(y.astype(MM_DTYPE), wqkv_ref[l],
                      preferred_element_type=f32) + bqkv_ref[l]   # (BT, 3C)
        q16 = qkv[:, :C].astype(MM_DTYPE)
        k16 = qkv[:, C:2 * C].astype(MM_DTYPE)
        v16 = qkv[:, 2 * C:].astype(MM_DTYPE)

        # All heads at once: replicate bf16 K/V per head along rows and keep
        # each replica's own channel block via a {0,1} bf16 multiply.
        k_stack = jnp.concatenate([k16] * HEADS, axis=0) * stack_mask   # (HBT, C)
        v_stack = jnp.concatenate([v16] * HEADS, axis=0) * stack_mask   # (HBT, C)

        # scores: (BT, HBT) = (32, 128), rhs-transposed contraction over C
        s = lax.dot_general(q16, k_stack, (((1,), (1,)), ((), ())),
                            preferred_element_type=f32)
        s = s + attn_bias                       # kill cross-batch keys (one vadd)

        # per-head-block max (correct per-block softmax stabilization)
        m = None
        for hh in range(HEADS):
            blk = spread[hh:hh + 1, :]                                  # (1, HBT)
            mh = jnp.max(jnp.where(blk > 0.5, s, NEG_BIG),
                         axis=-1, keepdims=True)                        # (BT, 1)
            term = mh * blk                                             # (BT, HBT)
            m = term if m is None else m + term

        p16 = jnp.exp(s - m).astype(MM_DTYPE)   # unnormalized probs, <= 1

        # attention: unnormalized prob @ V and per-(row, head) denominator via
        # bf16 MXU matmuls; normalize on the small (BT, C) tile.
        attn_u = jnp.dot(p16, v_stack, preferred_element_type=f32)      # (BT, C)
        denom = jnp.dot(p16, stack_mask, preferred_element_type=f32)    # (BT, C)
        attn = attn_u * pl.reciprocal(denom, approx=True)

        attn = jnp.dot(attn.astype(MM_DTYPE), wo_ref[l],
                       preferred_element_type=f32) + bo_ref[l]
        y = _layernorm(y + attn, g1_ref[l], b1_ref[l])

        # ReLU FFN
        h1 = jnp.maximum(
            jnp.dot(y.astype(MM_DTYPE), w1_ref[l],
                    preferred_element_type=f32) + fb1_ref[l], 0.0)
        out = jnp.dot(h1.astype(MM_DTYPE), w2_ref[l],
                      preferred_element_type=f32) + fb2_ref[l]
        y = _layernorm(y + out, g2_ref[l], b2_ref[l])

    o_ref[...] = y


# ------------------------------------------------------------------
# Wrapper (single pallas_call; everything lives in VMEM, no grid)
# ------------------------------------------------------------------
def _vmem_spec():
    return pl.BlockSpec(memory_space=pltpu.MemorySpace.VMEM)


@jax.jit
def transformer_encoder(x, conv_params, layer_params):
    # x: (B, T, C).  F.dropout / layerdrop are identity in eval mode.
    wconv, cbias, g0, b0 = conv_params

    # im2col in the wrapper, built directly in bf16 (halves the largest input
    # DMA): xcol[b*T+t, k*C + c] = xpad[b, t+k, c].  Conv output length is
    # T+1; SamePad removes the last step for even K, so only positions
    # 0..T-1 are produced.
    x16 = x.astype(MM_DTYPE)
    xpad = jnp.pad(x16, ((0, 0), (PAD, PAD), (0, 0)))
    xcol = jnp.concatenate([xpad[:, kk:kk + T, :] for kk in range(CONV_POS)],
                           axis=-1).reshape(BT, KC)
    x2 = x16.reshape(BT, C)

    args = [x2, xcol, wconv, cbias, g0, b0,
            _STACK_MASK, _ATTN_BIAS, _SPREAD] + list(layer_params)
    out = pl.pallas_call(
        encoder_kernel,
        out_shape=jax.ShapeDtypeStruct((BT, C), jnp.float32),
        in_specs=[_vmem_spec() for _ in args],
        out_specs=_vmem_spec(),
    )(*args)
    return out.reshape(B, T, C)


# ------------------------------------------------------------------
# Deterministic synthetic parameter init (shapes follow the module)
# ------------------------------------------------------------------
def init_params(key):
    keys = iter(jax.random.split(key, 64))

    def nrm(shape, std=0.02):
        return std * jax.random.normal(next(keys), shape, jnp.float32)

    # --- pos_conv: grouped Conv1d with weight_norm(dim=2) ---
    cig = C // CONV_GROUPS
    std = math.sqrt(4.0 / (CONV_POS * C))
    v = std * jax.random.normal(next(keys), (C, cig, CONV_POS), jnp.float32)
    g = 1.0 + 0.1 * jax.random.normal(next(keys), (1, 1, CONV_POS), jnp.float32)
    norm = jnp.sqrt(jnp.sum(v * v, axis=(0, 1), keepdims=True))
    w_eff = v * (g / norm)                           # (C_out, C_in/groups, K)

    # Expand grouped conv into per-tap block-diagonal (K, C_in, C_out) and
    # flatten the taps into the contraction dim: (K*C, C) for one matmul.
    wk_full = jnp.zeros((CONV_POS, C, C), jnp.float32)
    for co in range(C):
        gp = co // cig
        wk_full = wk_full.at[:, gp * cig:(gp + 1) * cig, co].set(w_eff[co].T)
    wconv = wk_full.reshape(KC, C).astype(MM_DTYPE)
    cbias = jnp.zeros((1, C), jnp.float32)           # nn.init.constant_(bias, 0)
    g0 = jnp.ones((1, C), jnp.float32)
    b0 = jnp.zeros((1, C), jnp.float32)

    scale = DH ** -0.5
    wqkv, bqkv, wo, bo = [], [], [], []
    g1, b1, w1, fb1, w2, fb2, g2, b2 = [], [], [], [], [], [], [], []
    for _ in range(LAYERS):
        wq = nrm((C, C)) * scale                     # fold q-scaling into Wq
        wk = nrm((C, C))
        wv = nrm((C, C))
        wqkv.append(jnp.concatenate([wq, wk, wv], axis=1))          # (C, 3C)
        bqkv.append(jnp.zeros((1, 3 * C), jnp.float32))             # (bq*scale=0)
        wo.append(nrm((C, C)))
        bo.append(jnp.zeros((1, C), jnp.float32))
        g1.append(jnp.ones((1, C), jnp.float32))
        b1.append(jnp.zeros((1, C), jnp.float32))
        w1.append(nrm((C, FFN)))
        fb1.append(jnp.zeros((1, FFN), jnp.float32))
        w2.append(nrm((FFN, C)))
        fb2.append(jnp.zeros((1, C), jnp.float32))
        g2.append(jnp.ones((1, C), jnp.float32))
        b2.append(jnp.zeros((1, C), jnp.float32))

    def stk(xs, dt=jnp.float32):
        return jnp.stack(xs).astype(dt)

    layer_params = (stk(wqkv, MM_DTYPE), stk(bqkv), stk(wo, MM_DTYPE), stk(bo),
                    stk(g1), stk(b1),
                    stk(w1, MM_DTYPE), stk(fb1), stk(w2, MM_DTYPE), stk(fb2),
                    stk(g2), stk(b2))
    conv_params = (wconv, cbias, g0, b0)
    return conv_params, layer_params


if __name__ == "__main__":
    key = jax.random.PRNGKey(0)
    kx, kp = jax.random.split(key)
    x = jax.random.normal(kx, (B, T, C), jnp.float32)
    conv_params, layer_params = init_params(kp)

    out = transformer_encoder(x, conv_params, layer_params)
    out = jax.block_until_ready(out)
    assert out.shape == (B, T, C)
    assert bool(jnp.all(jnp.isfinite(out)))
    print("KERNEL_OK")
</pallas_src>

<mosaic_0001>
module attributes {stable_mosaic.version = 11 : i64} {
  func.func @encoder_kernel(%arg0: memref<32x32xbf16, #tpu.memory_space<vmem>>, %arg1: memref<32x256xbf16, #tpu.memory_space<vmem>>, %arg2: memref<256x32xbf16, #tpu.memory_space<vmem>>, %arg3: memref<1x32xf32, #tpu.memory_space<vmem>>, %arg4: memref<1x32xf32, #tpu.memory_space<vmem>>, %arg5: memref<1x32xf32, #tpu.memory_space<vmem>>, %arg6: memref<128x32xbf16, #tpu.memory_space<vmem>>, %arg7: memref<32x128xf32, #tpu.memory_space<vmem>>, %arg8: memref<4x128xf32, #tpu.memory_space<vmem>>, %arg9: memref<2x32x96xbf16, #tpu.memory_space<vmem>>, %arg10: memref<2x1x96xf32, #tpu.memory_space<vmem>>, %arg11: memref<2x32x32xbf16, #tpu.memory_space<vmem>>, %arg12: memref<2x1x32xf32, #tpu.memory_space<vmem>>, %arg13: memref<2x1x32xf32, #tpu.memory_space<vmem>>, %arg14: memref<2x1x32xf32, #tpu.memory_space<vmem>>, %arg15: memref<2x32x64xbf16, #tpu.memory_space<vmem>>, %arg16: memref<2x1x64xf32, #tpu.memory_space<vmem>>, %arg17: memref<2x64x32xbf16, #tpu.memory_space<vmem>>, %arg18: memref<2x1x32xf32, #tpu.memory_space<vmem>>, %arg19: memref<2x1x32xf32, #tpu.memory_space<vmem>>, %arg20: memref<2x1x32xf32, #tpu.memory_space<vmem>>, %arg21: memref<32x32xf32, #tpu.memory_space<vmem>>) attributes {dimension_semantics = [], scalar_prefetch = 0 : i64, scratch_operands = 0 : i64, tpu.core_type = #tpu.core_type<tc>} {
    %c0 = arith.constant 0 : index
    %c0_0 = arith.constant 0 : index
    %0 = vector.load %arg6[%c0, %c0_0] : memref<128x32xbf16, #tpu.memory_space<vmem>>, vector<128x32xbf16>
    %c0_1 = arith.constant 0 : index
    %c0_2 = arith.constant 0 : index
    %1 = vector.load %arg7[%c0_1, %c0_2] : memref<32x128xf32, #tpu.memory_space<vmem>>, vector<32x128xf32>
    %c0_3 = arith.constant 0 : index
    %c0_4 = arith.constant 0 : index
    %2 = vector.load %arg8[%c0_3, %c0_4] : memref<4x128xf32, #tpu.memory_space<vmem>>, vector<4x128xf32>
    %c0_5 = arith.constant 0 : index
    %c0_6 = arith.constant 0 : index
    %3 = vector.load %arg0[%c0_5, %c0_6] : memref<32x32xbf16, #tpu.memory_space<vmem>>, vector<32x32xbf16>
    %4 = arith.extf %3 : vector<32x32xbf16> to vector<32x32xf32>
    %c0_7 = arith.constant 0 : index
    %c0_8 = arith.constant 0 : index
    %5 = vector.load %arg1[%c0_7, %c0_8] : memref<32x256xbf16, #tpu.memory_space<vmem>>, vector<32x256xbf16>
    %c0_9 = arith.constant 0 : index
    %c0_10 = arith.constant 0 : index
    %6 = vector.load %arg2[%c0_9, %c0_10] : memref<256x32xbf16, #tpu.memory_space<vmem>>, vector<256x32xbf16>
    %cst = arith.constant dense<0.000000e+00> : vector<32x32xf32>
    %7 = tpu.matmul %5, %6, %cst {dimension_numbers = #tpu.dot_dimension_numbers<[1], [0], [0], [1], [0, 0, 1, 1], [], []>} : vector<32x256xbf16>, vector<256x32xbf16>, vector<32x32xf32> -> vector<32x32xf32>
    %c0_11 = arith.constant 0 : index
    %c0_12 = arith.constant 0 : index
    %8 = vector.load %arg3[%c0_11, %c0_12] : memref<1x32xf32, #tpu.memory_space<vmem>>, vector<1x32xf32>
    %9 = vector.broadcast %8 : vector<1x32xf32> to vector<32x32xf32>
    %10 = arith.addf %7, %9 : vector<32x32xf32>
    %cst_13 = arith.constant 5.000000e-01 : f32
    %11 = vector.broadcast %cst_13 : f32 to vector<32x32xf32>
    %12 = arith.mulf %11, %10 : vector<32x32xf32>
    %cst_14 = arith.constant 0.707106769 : f32
    %13 = vector.broadcast %cst_14 : f32 to vector<32x32xf32>
    %14 = arith.mulf %10, %13 : vector<32x32xf32>
    %15 = math.erf %14 : vector<32x32xf32>
    %cst_15 = arith.constant 1.000000e+00 : f32
    %16 = vector.broadcast %cst_15 : f32 to vector<32x32xf32>
    %17 = arith.addf %16, %15 : vector<32x32xf32>
    %18 = arith.mulf %12, %17 : vector<32x32xf32>
    %19 = arith.addf %4, %18 : vector<32x32xf32>
    %c0_16 = arith.constant 0 : index
    %c0_17 = arith.constant 0 : index
    %20 = vector.load %arg4[%c0_16, %c0_17] : memref<1x32xf32, #tpu.memory_space<vmem>>, vector<1x32xf32>
    %c0_18 = arith.constant 0 : index
    %c0_19 = arith.constant 0 : index
    %21 = vector.load %arg5[%c0_18, %c0_19] : memref<1x32xf32, #tpu.memory_space<vmem>>, vector<1x32xf32>
    %cst_20 = arith.constant dense<0.000000e+00> : vector<32xf32>
    %22 = vector.multi_reduction <add>, %19, %cst_20 [1] : vector<32x32xf32> to vector<32xf32>
    %23 = vector.shape_cast %22 : vector<32xf32> to vector<32x1xf32>
    %cst_21 = arith.constant 3.200000e+01 : f32
    %24 = vector.broadcast %cst_21 : f32 to vector<32x1xf32>
    %25 = arith.divf %23, %24 : vector<32x1xf32>
    %26 = arith.mulf %19, %19 : vector<32x32xf32>
    %cst_22 = arith.constant dense<0.000000e+00> : vector<32xf32>
    %27 = vector.multi_reduction <add>, %26, %cst_22 [1] : vector<32x32xf32> to vector<32xf32>
    %28 = vector.shape_cast %27 : vector<32xf32> to vector<32x1xf32>
    %cst_23 = arith.constant 3.200000e+01 : f32
    %29 = vector.broadcast %cst_23 : f32 to vector<32x1xf32>
    %30 = arith.divf %28, %29 : vector<32x1xf32>
    %31 = arith.mulf %25, %25 : vector<32x1xf32>
    %32 = arith.subf %30, %31 : vector<32x1xf32>
    %cst_24 = arith.constant 0.000000e+00 : f32
    %33 = vector.broadcast %cst_24 : f32 to vector<32x1xf32>
    %34 = arith.maximumf %32, %33 : vector<32x1xf32>
    %35 = vector.broadcast %25 : vector<32x1xf32> to vector<32x32xf32>
    %36 = arith.subf %19, %35 : vector<32x32xf32>
    %cst_25 = arith.constant 9.99999974E-6 : f32
    %37 = vector.broadcast %cst_25 : f32 to vector<32x1xf32>
    %38 = arith.addf %34, %37 : vector<32x1xf32>
    %39 = math.rsqrt %38 : vector<32x1xf32>
    %40 = vector.broadcast %39 : vector<32x1xf32> to vector<32x32xf32>
    %41 = arith.mulf %36, %40 : vector<32x32xf32>
    %42 = vector.broadcast %20 : vector<1x32xf32> to vector<32x32xf32>
    %43 = arith.mulf %41, %42 : vector<32x32xf32>
    %44 = vector.broadcast %21 : vector<1x32xf32> to vector<32x32xf32>
    %45 = arith.addf %43, %44 : vector<32x32xf32>
    %46 = arith.truncf %45 : vector<32x32xf32> to vector<32x32xbf16>
    %c0_26 = arith.constant 0 : index
    %c0_27 = arith.constant 0 : index
    %c0_28 = arith.constant 0 : index
    %47 = vector.load %arg9[%c0_26, %c0_27, %c0_28] : memref<2x32x96xbf16, #tpu.memory_space<vmem>>, vector<1x32x96xbf16>
    %48 = vector.shape_cast %47 : vector<1x32x96xbf16> to vector<32x96xbf16>
    %cst_29 = arith.constant dense<0.000000e+00> : vector<32x96xf32>
    %49 = tpu.matmul %46, %48, %cst_29 {dimension_numbers = #tpu.dot_dimension_numbers<[1], [0], [0], [1], [0, 0, 1, 1], [], []>} : vector<32x32xbf16>, vector<32x96xbf16>, vector<32x96xf32> -> vector<32x96xf32>
    %c0_30 = arith.constant 0 : index
    %c0_31 = arith.constant 0 : index
    %c0_32 = arith.constant 0 : index
    %50 = vector.load %arg10[%c0_30, %c0_31, %c0_32] : memref<2x1x96xf32, #tpu.memory_space<vmem>>, vector<1x1x96xf32>
    %51 = vector.shape_cast %50 : vector<1x1x96xf32> to vector<1x96xf32>
    %52 = vector.broadcast %51 : vector<1x96xf32> to vector<32x96xf32>
    %53 = arith.addf %49, %52 : vector<32x96xf32>
    %54 = vector.extract_strided_slice %53 {offsets = [0, 0], sizes = [32, 32], strides = [1, 1]} : vector<32x96xf32> to vector<32x32xf32>
    %55 = arith.truncf %54 : vector<32x32xf32> to vector<32x32xbf16>
    %56 = vector.extract_strided_slice %53 {offsets = [0, 32], sizes = [32, 32], strides = [1, 1]} : vector<32x96xf32> to vector<32x32xf32>
    %57 = arith.truncf %56 : vector<32x32xf32> to vector<32x32xbf16>
    %58 = vector.extract_strided_slice %53 {offsets = [0, 64], sizes = [32, 32], strides = [1, 1]} : vector<32x96xf32> to vector<32x32xf32>
    %59 = arith.truncf %58 : vector<32x32xf32> to vector<32x32xbf16>
    %60 = tpu.concatenate %57, %57, %57, %57 in 0 : vector<32x32xbf16>, vector<32x32xbf16>, vector<32x32xbf16>, vector<32x32xbf16> -> vector<128x32xbf16>
    %61 = arith.mulf %60, %0 : vector<128x32xbf16>
    %62 = tpu.concatenate %59, %59, %59, %59 in 0 : vector<32x32xbf16>, vector<32x32xbf16>, vector<32x32xbf16>, vector<32x32xbf16> -> vector<128x32xbf16>
    %63 = arith.mulf %62, %0 : vector<128x32xbf16>
    %cst_33 = arith.constant dense<0.000000e+00> : vector<32x128xf32>
    %64 = tpu.matmul %55, %61, %cst_33 {dimension_numbers = #tpu.dot_dimension_numbers<[1], [1], [0], [0], [0, 0, 1, 0], [], []>} : vector<32x32xbf16>, vector<128x32xbf16>, vector<32x128xf32> -> vector<32x128xf32>
    %65 = arith.addf %64, %1 : vector<32x128xf32>
    %66 = vector.extract_strided_slice %2 {offsets = [0, 0], sizes = [1, 128], strides = [1, 1]} : vector<4x128xf32> to vector<1x128xf32>
    %cst_34 = arith.constant 5.000000e-01 : f32
    %67 = vector.broadcast %cst_34 : f32 to vector<1x128xf32>
    %68 = arith.cmpf ogt, %66, %67 : vector<1x128xf32>
    %cst_35 = arith.constant -1.000000e+30 : f32
    %69 = vector.shape_cast %68 : vector<1x128xi1> to vector<1x128xi1>
    %70 = vector.broadcast %69 : vector<1x128xi1> to vector<32x128xi1>
    %71 = vector.broadcast %cst_35 : f32 to vector<32x128xf32>
    %72 = arith.select %70, %65, %71 : vector<32x128xi1>, vector<32x128xf32>
    %cst_36 = arith.constant dense<0xFF800000> : vector<32xf32>
    %73 = vector.multi_reduction <maximumf>, %72, %cst_36 [1] : vector<32x128xf32> to vector<32xf32>
    %74 = vector.shape_cast %73 : vector<32xf32> to vector<32x1xf32>
    %75 = vector.broadcast %74 : vector<32x1xf32> to vector<32x128xf32>
    %76 = vector.broadcast %66 : vector<1x128xf32> to vector<32x128xf32>
    %77 = arith.mulf %75, %76 : vector<32x128xf32>
    %78 = vector.extract_strided_slice %2 {offsets = [1, 0], sizes = [1, 128], strides = [1, 1]} : vector<4x128xf32> to vector<1x128xf32>
    %cst_37 = arith.constant 5.000000e-01 : f32
    %79 = vector.broadcast %cst_37 : f32 to vector<1x128xf32>
    %80 = arith.cmpf ogt, %78, %79 : vector<1x128xf32>
    %cst_38 = arith.constant -1.000000e+30 : f32
    %81 = vector.shape_cast %80 : vector<1x128xi1> to vector<1x128xi1>
    %82 = vector.broadcast %81 : vector<1x128xi1> to vector<32x128xi1>
    %83 = vector.broadcast %cst_38 : f32 to vector<32x128xf32>
    %84 = arith.select %82, %65, %83 : vector<32x128xi1>, vector<32x128xf32>
    %cst_39 = arith.constant dense<0xFF800000> : vector<32xf32>
    %85 = vector.multi_reduction <maximumf>, %84, %cst_39 [1] : vector<32x128xf32> to vector<32xf32>
    %86 = vector.shape_cast %85 : vector<32xf32> to vector<32x1xf32>
    %87 = vector.broadcast %86 : vector<32x1xf32> to vector<32x128xf32>
    %88 = vector.broadcast %78 : vector<1x128xf32> to vector<32x128xf32>
    %89 = arith.mulf %87, %88 : vector<32x128xf32>
    %90 = arith.addf %77, %89 : vector<32x128xf32>
    %91 = vector.extract_strided_slice %2 {offsets = [2, 0], sizes = [1, 128], strides = [1, 1]} : vector<4x128xf32> to vector<1x128xf32>
    %cst_40 = arith.constant 5.000000e-01 : f32
    %92 = vector.broadcast %cst_40 : f32 to vector<1x128xf32>
    %93 = arith.cmpf ogt, %91, %92 : vector<1x128xf32>
    %cst_41 = arith.constant -1.000000e+30 : f32
    %94 = vector.shape_cast %93 : vector<1x128xi1> to vector<1x128xi1>
    %95 = vector.broadcast %94 : vector<1x128xi1> to vector<32x128xi1>
    %96 = vector.broadcast %cst_41 : f32 to vector<32x128xf32>
    %97 = arith.select %95, %65, %96 : vector<32x128xi1>, vector<32x128xf32>
    %cst_42 = arith.constant dense<0xFF800000> : vector<32xf32>
    %98 = vector.multi_reduction <maximumf>, %97, %cst_42 [1] : vector<32x128xf32> to vector<32xf32>
    %99 = vector.shape_cast %98 : vector<32xf32> to vector<32x1xf32>
    %100 = vector.broadcast %99 : vector<32x1xf32> to vector<32x128xf32>
    %101 = vector.broadcast %91 : vector<1x128xf32> to vector<32x128xf32>
    %102 = arith.mulf %100, %101 : vector<32x128xf32>
    %103 = arith.addf %90, %102 : vector<32x128xf32>
    %104 = vector.extract_strided_slice %2 {offsets = [3, 0], sizes = [1, 128], strides = [1, 1]} : vector<4x128xf32> to vector<1x128xf32>
    %cst_43 = arith.constant 5.000000e-01 : f32
    %105 = vector.broadcast %cst_43 : f32 to vector<1x128xf32>
    %106 = arith.cmpf ogt, %104, %105 : vector<1x128xf32>
    %cst_44 = arith.constant -1.000000e+30 : f32
    %107 = vector.shape_cast %106 : vector<1x128xi1> to vector<1x128xi1>
    %108 = vector.broadcast %107 : vector<1x128xi1> to vector<32x128xi1>
    %109 = vector.broadcast %cst_44 : f32 to vector<32x128xf32>
    %110 = arith.select %108, %65, %109 : vector<32x128xi1>, vector<32x128xf32>
    %cst_45 = arith.constant dense<0xFF800000> : vector<32xf32>
    %111 = vector.multi_reduction <maximumf>, %110, %cst_45 [1] : vector<32x128xf32> to vector<32xf32>
    %112 = vector.shape_cast %111 : vector<32xf32> to vector<32x1xf32>
    %113 = vector.broadcast %112 : vector<32x1xf32> to vector<32x128xf32>
    %114 = vector.broadcast %104 : vector<1x128xf32> to vector<32x128xf32>
    %115 = arith.mulf %113, %114 : vector<32x128xf32>
    %116 = arith.addf %103, %115 : vector<32x128xf32>
    %117 = arith.subf %65, %116 : vector<32x128xf32>
    %118 = math.exp %117 : vector<32x128xf32>
    %119 = arith.truncf %118 : vector<32x128xf32> to vector<32x128xbf16>
    %cst_46 = arith.constant dense<0.000000e+00> : vector<32x32xf32>
    %120 = tpu.matmul %119, %63, %cst_46 {dimension_numbers = #tpu.dot_dimension_numbers<[1], [0], [0], [1], [0, 0, 1, 1], [], []>} : vector<32x128xbf16>, vector<128x32xbf16>, vector<32x32xf32> -> vector<32x32xf32>
    %cst_47 = arith.constant dense<0.000000e+00> : vector<32x32xf32>
    %121 = tpu.matmul %119, %0, %cst_47 {dimension_numbers = #tpu.dot_dimension_numbers<[1], [0], [0], [1], [0, 0, 1, 1], [], []>} : vector<32x128xbf16>, vector<128x32xbf16>, vector<32x32xf32> -> vector<32x32xf32>
    %122 = tpu.reciprocal %121 {approx = true} : vector<32x32xf32> -> vector<32x32xf32>
    %123 = arith.mulf %120, %122 : vector<32x32xf32>
    %124 = arith.truncf %123 : vector<32x32xf32> to vector<32x32xbf16>
    %c0_48 = arith.constant 0 : index
    %c0_49 = arith.constant 0 : index
    %c0_50 = arith.constant 0 : index
    %125 = vector.load %arg11[%c0_48, %c0_49, %c0_50] : memref<2x32x32xbf16, #tpu.memory_space<vmem>>, vector<1x32x32xbf16>
    %126 = vector.shape_cast %125 : vector<1x32x32xbf16> to vector<32x32xbf16>
    %cst_51 = arith.constant dense<0.000000e+00> : vector<32x32xf32>
    %127 = tpu.matmul %124, %126, %cst_51 {dimension_numbers = #tpu.dot_dimension_numbers<[1], [0], [0], [1], [0, 0, 1, 1], [], []>} : vector<32x32xbf16>, vector<32x32xbf16>, vector<32x32xf32> -> vector<32x32xf32>
    %c0_52 = arith.constant 0 : index
    %c0_53 = arith.constant 0 : index
    %c0_54 = arith.constant 0 : index
    %128 = vector.load %arg12[%c0_52, %c0_53, %c0_54] : memref<2x1x32xf32, #tpu.memory_space<vmem>>, vector<1x1x32xf32>
    %129 = vector.shape_cast %128 : vector<1x1x32xf32> to vector<1x32xf32>
    %130 = vector.broadcast %129 : vector<1x32xf32> to vector<32x32xf32>
    %131 = arith.addf %127, %130 : vector<32x32xf32>
    %132 = arith.addf %45, %131 : vector<32x32xf32>
    %c0_55 = arith.constant 0 : index
    %c0_56 = arith.constant 0 : index
    %c0_57 = arith.constant 0 : index
    %133 = vector.load %arg13[%c0_55, %c0_56, %c0_57] : memref<2x1x32xf32, #tpu.memory_space<vmem>>, vector<1x1x32xf32>
    %134 = vector.shape_cast %133 : vector<1x1x32xf32> to vector<1x32xf32>
    %c0_58 = arith.constant 0 : index
    %c0_59 = arith.constant 0 : index
    %c0_60 = arith.constant 0 : index
    %135 = vector.load %arg14[%c0_58, %c0_59, %c0_60] : memref<2x1x32xf32, #tpu.memory_space<vmem>>, vector<1x1x32xf32>
    %136 = vector.shape_cast %135 : vector<1x1x32xf32> to vector<1x32xf32>
    %cst_61 = arith.constant dense<0.000000e+00> : vector<32xf32>
    %137 = vector.multi_reduction <add>, %132, %cst_61 [1] : vector<32x32xf32> to vector<32xf32>
    %138 = vector.shape_cast %137 : vector<32xf32> to vector<32x1xf32>
    %cst_62 = arith.constant 3.200000e+01 : f32
    %139 = vector.broadcast %cst_62 : f32 to vector<32x1xf32>
    %140 = arith.divf %138, %139 : vector<32x1xf32>
    %141 = arith.mulf %132, %132 : vector<32x32xf32>
    %cst_63 = arith.constant dense<0.000000e+00> : vector<32xf32>
    %142 = vector.multi_reduction <add>, %141, %cst_63 [1] : vector<32x32xf32> to vector<32xf32>
    %143 = vector.shape_cast %142 : vector<32xf32> to vector<32x1xf32>
    %cst_64 = arith.constant 3.200000e+01 : f32
    %144 = vector.broadcast %cst_64 : f32 to vector<32x1xf32>
    %145 = arith.divf %143, %144 : vector<32x1xf32>
    %146 = arith.mulf %140, %140 : vector<32x1xf32>
    %147 = arith.subf %145, %146 : vector<32x1xf32>
    %cst_65 = arith.constant 0.000000e+00 : f32
    %148 = vector.broadcast %cst_65 : f32 to vector<32x1xf32>
    %149 = arith.maximumf %147, %148 : vector<32x1xf32>
    %150 = vector.broadcast %140 : vector<32x1xf32> to vector<32x32xf32>
    %151 = arith.subf %132, %150 : vector<32x32xf32>
    %cst_66 = arith.constant 9.99999974E-6 : f32
    %152 = vector.broadcast %cst_66 : f32 to vector<32x1xf32>
    %153 = arith.addf %149, %152 : vector<32x1xf32>
    %154 = math.rsqrt %153 : vector<32x1xf32>
    %155 = vector.broadcast %154 : vector<32x1xf32> to vector<32x32xf32>
    %156 = arith.mulf %151, %155 : vector<32x32xf32>
    %157 = vector.broadcast %134 : vector<1x32xf32> to vector<32x32xf32>
    %158 = arith.mulf %156, %157 : vector<32x32xf32>
    %159 = vector.broadcast %136 : vector<1x32xf32> to vector<32x32xf32>
    %160 = arith.addf %158, %159 : vector<32x32xf32>
    %161 = arith.truncf %160 : vector<32x32xf32> to vector<32x32xbf16>
    %c0_67 = arith.constant 0 : index
    %c0_68 = arith.constant 0 : index
    %c0_69 = arith.constant 0 : index
    %162 = vector.load %arg15[%c0_67, %c0_68, %c0_69] : memref<2x32x64xbf16, #tpu.memory_space<vmem>>, vector<1x32x64xbf16>
    %163 = vector.shape_cast %162 : vector<1x32x64xbf16> to vector<32x64xbf16>
    %cst_70 = arith.constant dense<0.000000e+00> : vector<32x64xf32>
    %164 = tpu.matmul %161, %163, %cst_70 {dimension_numbers = #tpu.dot_dimension_numbers<[1], [0], [0], [1], [0, 0, 1, 1], [], []>} : vector<32x32xbf16>, vector<32x64xbf16>, vector<32x64xf32> -> vector<32x64xf32>
    %c0_71 = arith.constant 0 : index
    %c0_72 = arith.constant 0 : index
    %c0_73 = arith.constant 0 : index
    %165 = vector.load %arg16[%c0_71, %c0_72, %c0_73] : memref<2x1x64xf32, #tpu.memory_space<vmem>>, vector<1x1x64xf32>
    %166 = vector.shape_cast %165 : vector<1x1x64xf32> to vector<1x64xf32>
    %167 = vector.broadcast %166 : vector<1x64xf32> to vector<32x64xf32>
    %168 = arith.addf %164, %167 : vector<32x64xf32>
    %cst_74 = arith.constant 0.000000e+00 : f32
    %169 = vector.broadcast %cst_74 : f32 to vector<32x64xf32>
    %170 = arith.maximumf %168, %169 : vector<32x64xf32>
    %171 = arith.truncf %170 : vector<32x64xf32> to vector<32x64xbf16>
    %c0_75 = arith.constant 0 : index
    %c0_76 = arith.constant 0 : index
    %c0_77 = arith.constant 0 : index
    %172 = vector.load %arg17[%c0_75, %c0_76, %c0_77] : memref<2x64x32xbf16, #tpu.memory_space<vmem>>, vector<1x64x32xbf16>
    %173 = vector.shape_cast %172 : vector<1x64x32xbf16> to vector<64x32xbf16>
    %cst_78 = arith.constant dense<0.000000e+00> : vector<32x32xf32>
    %174 = tpu.matmul %171, %173, %cst_78 {dimension_numbers = #tpu.dot_dimension_numbers<[1], [0], [0], [1], [0, 0, 1, 1], [], []>} : vector<32x64xbf16>, vector<64x32xbf16>, vector<32x32xf32> -> vector<32x32xf32>
    %c0_79 = arith.constant 0 : index
    %c0_80 = arith.constant 0 : index
    %c0_81 = arith.constant 0 : index
    %175 = vector.load %arg18[%c0_79, %c0_80, %c0_81] : memref<2x1x32xf32, #tpu.memory_space<vmem>>, vector<1x1x32xf32>
    %176 = vector.shape_cast %175 : vector<1x1x32xf32> to vector<1x32xf32>
    %177 = vector.broadcast %176 : vector<1x32xf32> to vector<32x32xf32>
    %178 = arith.addf %174, %177 : vector<32x32xf32>
    %179 = arith.addf %160, %178 : vector<32x32xf32>
    %c0_82 = arith.constant 0 : index
    %c0_83 = arith.constant 0 : index
    %c0_84 = arith.constant 0 : index
    %180 = vector.load %arg19[%c0_82, %c0_83, %c0_84] : memref<2x1x32xf32, #tpu.memory_space<vmem>>, vector<1x1x32xf32>
    %181 = vector.shape_cast %180 : vector<1x1x32xf32> to vector<1x32xf32>
    %c0_85 = arith.constant 0 : index
    %c0_86 = arith.constant 0 : index
    %c0_87 = arith.constant 0 : index
    %182 = vector.load %arg20[%c0_85, %c0_86, %c0_87] : memref<2x1x32xf32, #tpu.memory_space<vmem>>, vector<1x1x32xf32>
    %183 = vector.shape_cast %182 : vector<1x1x32xf32> to vector<1x32xf32>
    %cst_88 = arith.constant dense<0.000000e+00> : vector<32xf32>
    %184 = vector.multi_reduction <add>, %179, %cst_88 [1] : vector<32x32xf32> to vector<32xf32>
    %185 = vector.shape_cast %184 : vector<32xf32> to vector<32x1xf32>
    %cst_89 = arith.constant 3.200000e+01 : f32
    %186 = vector.broadcast %cst_89 : f32 to vector<32x1xf32>
    %187 = arith.divf %185, %186 : vector<32x1xf32>
    %188 = arith.mulf %179, %179 : vector<32x32xf32>
    %cst_90 = arith.constant dense<0.000000e+00> : vector<32xf32>
    %189 = vector.multi_reduction <add>, %188, %cst_90 [1] : vector<32x32xf32> to vector<32xf32>
    %190 = vector.shape_cast %189 : vector<32xf32> to vector<32x1xf32>
    %cst_91 = arith.constant 3.200000e+01 : f32
    %191 = vector.broadcast %cst_91 : f32 to vector<32x1xf32>
    %192 = arith.divf %190, %191 : vector<32x1xf32>
    %193 = arith.mulf %187, %187 : vector<32x1xf32>
    %194 = arith.subf %192, %193 : vector<32x1xf32>
    %cst_92 = arith.constant 0.000000e+00 : f32
    %195 = vector.broadcast %cst_92 : f32 to vector<32x1xf32>
    %196 = arith.maximumf %194, %195 : vector<32x1xf32>
    %197 = vector.broadcast %187 : vector<32x1xf32> to vector<32x32xf32>
    %198 = arith.subf %179, %197 : vector<32x32xf32>
    %cst_93 = arith.constant 9.99999974E-6 : f32
    %199 = vector.broadcast %cst_93 : f32 to vector<32x1xf32>
    %200 = arith.addf %196, %199 : vector<32x1xf32>
    %201 = math.rsqrt %200 : vector<32x1xf32>
    %202 = vector.broadcast %201 : vector<32x1xf32> to vector<32x32xf32>
    %203 = arith.mulf %198, %202 : vector<32x32xf32>
    %204 = vector.broadcast %181 : vector<1x32xf32> to vector<32x32xf32>
    %205 = arith.mulf %203, %204 : vector<32x32xf32>
    %206 = vector.broadcast %183 : vector<1x32xf32> to vector<32x32xf32>
    %207 = arith.addf %205, %206 : vector<32x32xf32>
    %208 = arith.truncf %207 : vector<32x32xf32> to vector<32x32xbf16>
    %c1 = arith.constant 1 : index
    %c0_94 = arith.constant 0 : index
    %c0_95 = arith.constant 0 : index
    %209 = vector.load %arg9[%c1, %c0_94, %c0_95] : memref<2x32x96xbf16, #tpu.memory_space<vmem>>, vector<1x32x96xbf16>
    %210 = vector.shape_cast %209 : vector<1x32x96xbf16> to vector<32x96xbf16>
    %cst_96 = arith.constant dense<0.000000e+00> : vector<32x96xf32>
    %211 = tpu.matmul %208, %210, %cst_96 {dimension_numbers = #tpu.dot_dimension_numbers<[1], [0], [0], [1], [0, 0, 1, 1], [], []>} : vector<32x32xbf16>, vector<32x96xbf16>, vector<32x96xf32> -> vector<32x96xf32>
    %c1_97 = arith.constant 1 : index
    %c0_98 = arith.constant 0 : index
    %c0_99 = arith.constant 0 : index
    %212 = vector.load %arg10[%c1_97, %c0_98, %c0_99] : memref<2x1x96xf32, #tpu.memory_space<vmem>>, vector<1x1x96xf32>
    %213 = vector.shape_cast %212 : vector<1x1x96xf32> to vector<1x96xf32>
    %214 = vector.broadcast %213 : vector<1x96xf32> to vector<32x96xf32>
    %215 = arith.addf %211, %214 : vector<32x96xf32>
    %216 = vector.extract_strided_slice %215 {offsets = [0, 0], sizes = [32, 32], strides = [1, 1]} : vector<32x96xf32> to vector<32x32xf32>
    %217 = arith.truncf %216 : vector<32x32xf32> to vector<32x32xbf16>
    %218 = vector.extract_strided_slice %215 {offsets = [0, 32], sizes = [32, 32], strides = [1, 1]} : vector<32x96xf32> to vector<32x32xf32>
    %219 = arith.truncf %218 : vector<32x32xf32> to vector<32x32xbf16>
    %220 = vector.extract_strided_slice %215 {offsets = [0, 64], sizes = [32, 32], strides = [1, 1]} : vector<32x96xf32> to vector<32x32xf32>
    %221 = arith.truncf %220 : vector<32x32xf32> to vector<32x32xbf16>
    %222 = tpu.concatenate %219, %219, %219, %219 in 0 : vector<32x32xbf16>, vector<32x32xbf16>, vector<32x32xbf16>, vector<32x32xbf16> -> vector<128x32xbf16>
    %223 = arith.mulf %222, %0 : vector<128x32xbf16>
    %224 = tpu.concatenate %221, %221, %221, %221 in 0 : vector<32x32xbf16>, vector<32x32xbf16>, vector<32x32xbf16>, vector<32x32xbf16> -> vector<128x32xbf16>
    %225 = arith.mulf %224, %0 : vector<128x32xbf16>
    %cst_100 = arith.constant dense<0.000000e+00> : vector<32x128xf32>
    %226 = tpu.matmul %217, %223, %cst_100 {dimension_numbers = #tpu.dot_dimension_numbers<[1], [1], [0], [0], [0, 0, 1, 0], [], []>} : vector<32x32xbf16>, vector<128x32xbf16>, vector<32x128xf32> -> vector<32x128xf32>
    %227 = arith.addf %226, %1 : vector<32x128xf32>
    %228 = vector.extract_strided_slice %2 {offsets = [0, 0], sizes = [1, 128], strides = [1, 1]} : vector<4x128xf32> to vector<1x128xf32>
    %cst_101 = arith.constant 5.000000e-01 : f32
    %229 = vector.broadcast %cst_101 : f32 to vector<1x128xf32>
    %230 = arith.cmpf ogt, %228, %229 : vector<1x128xf32>
    %cst_102 = arith.constant -1.000000e+30 : f32
    %231 = vector.shape_cast %230 : vector<1x128xi1> to vector<1x128xi1>
    %232 = vector.broadcast %231 : vector<1x128xi1> to vector<32x128xi1>
    %233 = vector.broadcast %cst_102 : f32 to vector<32x128xf32>
    %234 = arith.select %232, %227, %233 : vector<32x128xi1>, vector<32x128xf32>
    %cst_103 = arith.constant dense<0xFF800000> : vector<32xf32>
    %235 = vector.multi_reduction <maximumf>, %234, %cst_103 [1] : vector<32x128xf32> to vector<32xf32>
    %236 = vector.shape_cast %235 : vector<32xf32> to vector<32x1xf32>
    %237 = vector.broadcast %236 : vector<32x1xf32> to vector<32x128xf32>
    %238 = vector.broadcast %228 : vector<1x128xf32> to vector<32x128xf32>
    %239 = arith.mulf %237, %238 : vector<32x128xf32>
    %240 = vector.extract_strided_slice %2 {offsets = [1, 0], sizes = [1, 128], strides = [1, 1]} : vector<4x128xf32> to vector<1x128xf32>
    %cst_104 = arith.constant 5.000000e-01 : f32
    %241 = vector.broadcast %cst_104 : f32 to vector<1x128xf32>
    %242 = arith.cmpf ogt, %240, %241 : vector<1x128xf32>
    %cst_105 = arith.constant -1.000000e+30 : f32
    %243 = vector.shape_cast %242 : vector<1x128xi1> to vector<1x128xi1>
    %244 = vector.broadcast %243 : vector<1x128xi1> to vector<32x128xi1>
    %245 = vector.broadcast %cst_105 : f32 to vector<32x128xf32>
    %246 = arith.select %244, %227, %245 : vector<32x128xi1>, vector<32x128xf32>
    %cst_106 = arith.constant dense<0xFF800000> : vector<32xf32>
    %247 = vector.multi_reduction <maximumf>, %246, %cst_106 [1] : vector<32x128xf32> to vector<32xf32>
    %248 = vector.shape_cast %247 : vector<32xf32> to vector<32x1xf32>
    %249 = vector.broadcast %248 : vector<32x1xf32> to vector<32x128xf32>
    %250 = vector.broadcast %240 : vector<1x128xf32> to vector<32x128xf32>
    %251 = arith.mulf %249, %250 : vector<32x128xf32>
    %252 = arith.addf %239, %251 : vector<32x128xf32>
    %253 = vector.extract_strided_slice %2 {offsets = [2, 0], sizes = [1, 128], strides = [1, 1]} : vector<4x128xf32> to vector<1x128xf32>
    %cst_107 = arith.constant 5.000000e-01 : f32
    %254 = vector.broadcast %cst_107 : f32 to vector<1x128xf32>
    %255 = arith.cmpf ogt, %253, %254 : vector<1x128xf32>
    %cst_108 = arith.constant -1.000000e+30 : f32
    %256 = vector.shape_cast %255 : vector<1x128xi1> to vector<1x128xi1>
    %257 = vector.broadcast %256 : vector<1x128xi1> to vector<32x128xi1>
    %258 = vector.broadcast %cst_108 : f32 to vector<32x128xf32>
    %259 = arith.select %257, %227, %258 : vector<32x128xi1>, vector<32x128xf32>
    %cst_109 = arith.constant dense<0xFF800000> : vector<32xf32>
    %260 = vector.multi_reduction <maximumf>, %259, %cst_109 [1] : vector<32x128xf32> to vector<32xf32>
    %261 = vector.shape_cast %260 : vector<32xf32> to vector<32x1xf32>
    %262 = vector.broadcast %261 : vector<32x1xf32> to vector<32x128xf32>
    %263 = vector.broadcast %253 : vector<1x128xf32> to vector<32x128xf32>
    %264 = arith.mulf %262, %263 : vector<32x128xf32>
    %265 = arith.addf %252, %264 : vector<32x128xf32>
    %266 = vector.extract_strided_slice %2 {offsets = [3, 0], sizes = [1, 128], strides = [1, 1]} : vector<4x128xf32> to vector<1x128xf32>
    %cst_110 = arith.constant 5.000000e-01 : f32
    %267 = vector.broadcast %cst_110 : f32 to vector<1x128xf32>
    %268 = arith.cmpf ogt, %266, %267 : vector<1x128xf32>
    %cst_111 = arith.constant -1.000000e+30 : f32
    %269 = vector.shape_cast %268 : vector<1x128xi1> to vector<1x128xi1>
    %270 = vector.broadcast %269 : vector<1x128xi1> to vector<32x128xi1>
    %271 = vector.broadcast %cst_111 : f32 to vector<32x128xf32>
    %272 = arith.select %270, %227, %271 : vector<32x128xi1>, vector<32x128xf32>
    %cst_112 = arith.constant dense<0xFF800000> : vector<32xf32>
    %273 = vector.multi_reduction <maximumf>, %272, %cst_112 [1] : vector<32x128xf32> to vector<32xf32>
    %274 = vector.shape_cast %273 : vector<32xf32> to vector<32x1xf32>
    %275 = vector.broadcast %274 : vector<32x1xf32> to vector<32x128xf32>
    %276 = vector.broadcast %266 : vector<1x128xf32> to vector<32x128xf32>
    %277 = arith.mulf %275, %276 : vector<32x128xf32>
    %278 = arith.addf %265, %277 : vector<32x128xf32>
    %279 = arith.subf %227, %278 : vector<32x128xf32>
    %280 = math.exp %279 : vector<32x128xf32>
    %281 = arith.truncf %280 : vector<32x128xf32> to vector<32x128xbf16>
    %cst_113 = arith.constant dense<0.000000e+00> : vector<32x32xf32>
    %282 = tpu.matmul %281, %225, %cst_113 {dimension_numbers = #tpu.dot_dimension_numbers<[1], [0], [0], [1], [0, 0, 1, 1], [], []>} : vector<32x128xbf16>, vector<128x32xbf16>, vector<32x32xf32> -> vector<32x32xf32>
    %cst_114 = arith.constant dense<0.000000e+00> : vector<32x32xf32>
    %283 = tpu.matmul %281, %0, %cst_114 {dimension_numbers = #tpu.dot_dimension_numbers<[1], [0], [0], [1], [0, 0, 1, 1], [], []>} : vector<32x128xbf16>, vector<128x32xbf16>, vector<32x32xf32> -> vector<32x32xf32>
    %284 = tpu.reciprocal %283 {approx = true} : vector<32x32xf32> -> vector<32x32xf32>
    %285 = arith.mulf %282, %284 : vector<32x32xf32>
    %286 = arith.truncf %285 : vector<32x32xf32> to vector<32x32xbf16>
    %c1_115 = arith.constant 1 : index
    %c0_116 = arith.constant 0 : index
    %c0_117 = arith.constant 0 : index
    %287 = vector.load %arg11[%c1_115, %c0_116, %c0_117] : memref<2x32x32xbf16, #tpu.memory_space<vmem>>, vector<1x32x32xbf16>
    %288 = vector.shape_cast %287 : vector<1x32x32xbf16> to vector<32x32xbf16>
    %cst_118 = arith.constant dense<0.000000e+00> : vector<32x32xf32>
    %289 = tpu.matmul %286, %288, %cst_118 {dimension_numbers = #tpu.dot_dimension_numbers<[1], [0], [0], [1], [0, 0, 1, 1], [], []>} : vector<32x32xbf16>, vector<32x32xbf16>, vector<32x32xf32> -> vector<32x32xf32>
    %c1_119 = arith.constant 1 : index
    %c0_120 = arith.constant 0 : index
    %c0_121 = arith.constant 0 : index
    %290 = vector.load %arg12[%c1_119, %c0_120, %c0_121] : memref<2x1x32xf32, #tpu.memory_space<vmem>>, vector<1x1x32xf32>
    %291 = vector.shape_cast %290 : vector<1x1x32xf32> to vector<1x32xf32>
    %292 = vector.broadcast %291 : vector<1x32xf32> to vector<32x32xf32>
    %293 = arith.addf %289, %292 : vector<32x32xf32>
    %294 = arith.addf %207, %293 : vector<32x32xf32>
    %c1_122 = arith.constant 1 : index
    %c0_123 = arith.constant 0 : index
    %c0_124 = arith.constant 0 : index
    %295 = vector.load %arg13[%c1_122, %c0_123, %c0_124] : memref<2x1x32xf32, #tpu.memory_space<vmem>>, vector<1x1x32xf32>
    %296 = vector.shape_cast %295 : vector<1x1x32xf32> to vector<1x32xf32>
    %c1_125 = arith.constant 1 : index
    %c0_126 = arith.constant 0 : index
    %c0_127 = arith.constant 0 : index
    %297 = vector.load %arg14[%c1_125, %c0_126, %c0_127] : memref<2x1x32xf32, #tpu.memory_space<vmem>>, vector<1x1x32xf32>
    %298 = vector.shape_cast %297 : vector<1x1x32xf32> to vector<1x32xf32>
    %cst_128 = arith.constant dense<0.000000e+00> : vector<32xf32>
    %299 = vector.multi_reduction <add>, %294, %cst_128 [1] : vector<32x32xf32> to vector<32xf32>
    %300 = vector.shape_cast %299 : vector<32xf32> to vector<32x1xf32>
    %cst_129 = arith.constant 3.200000e+01 : f32
    %301 = vector.broadcast %cst_129 : f32 to vector<32x1xf32>
    %302 = arith.divf %300, %301 : vector<32x1xf32>
    %303 = arith.mulf %294, %294 : vector<32x32xf32>
    %cst_130 = arith.constant dense<0.000000e+00> : vector<32xf32>
    %304 = vector.multi_reduction <add>, %303, %cst_130 [1] : vector<32x32xf32> to vector<32xf32>
    %305 = vector.shape_cast %304 : vector<32xf32> to vector<32x1xf32>
    %cst_131 = arith.constant 3.200000e+01 : f32
    %306 = vector.broadcast %cst_131 : f32 to vector<32x1xf32>
    %307 = arith.divf %305, %306 : vector<32x1xf32>
    %308 = arith.mulf %302, %302 : vector<32x1xf32>
    %309 = arith.subf %307, %308 : vector<32x1xf32>
    %cst_132 = arith.constant 0.000000e+00 : f32
    %310 = vector.broadcast %cst_132 : f32 to vector<32x1xf32>
    %311 = arith.maximumf %309, %310 : vector<32x1xf32>
    %312 = vector.broadcast %302 : vector<32x1xf32> to vector<32x32xf32>
    %313 = arith.subf %294, %312 : vector<32x32xf32>
    %cst_133 = arith.constant 9.99999974E-6 : f32
    %314 = vector.broadcast %cst_133 : f32 to vector<32x1xf32>
    %315 = arith.addf %311, %314 : vector<32x1xf32>
    %316 = math.rsqrt %315 : vector<32x1xf32>
    %317 = vector.broadcast %316 : vector<32x1xf32> to vector<32x32xf32>
    %318 = arith.mulf %313, %317 : vector<32x32xf32>
    %319 = vector.broadcast %296 : vector<1x32xf32> to vector<32x32xf32>
    %320 = arith.mulf %318, %319 : vector<32x32xf32>
    %321 = vector.broadcast %298 : vector<1x32xf32> to vector<32x32xf32>
    %322 = arith.addf %320, %321 : vector<32x32xf32>
    %323 = arith.truncf %322 : vector<32x32xf32> to vector<32x32xbf16>
    %c1_134 = arith.constant 1 : index
    %c0_135 = arith.constant 0 : index
    %c0_136 = arith.constant 0 : index
    %324 = vector.load %arg15[%c1_134, %c0_135, %c0_136] : memref<2x32x64xbf16, #tpu.memory_space<vmem>>, vector<1x32x64xbf16>
    %325 = vector.shape_cast %324 : vector<1x32x64xbf16> to vector<32x64xbf16>
    %cst_137 = arith.constant dense<0.000000e+00> : vector<32x64xf32>
    %326 = tpu.matmul %323, %325, %cst_137 {dimension_numbers = #tpu.dot_dimension_numbers<[1], [0], [0], [1], [0, 0, 1, 1], [], []>} : vector<32x32xbf16>, vector<32x64xbf16>, vector<32x64xf32> -> vector<32x64xf32>
    %c1_138 = arith.constant 1 : index
    %c0_139 = arith.constant 0 : index
    %c0_140 = arith.constant 0 : index
    %327 = vector.load %arg16[%c1_138, %c0_139, %c0_140] : memref<2x1x64xf32, #tpu.memory_space<vmem>>, vector<1x1x64xf32>
    %328 = vector.shape_cast %327 : vector<1x1x64xf32> to vector<1x64xf32>
    %329 = vector.broadcast %328 : vector<1x64xf32> to vector<32x64xf32>
    %330 = arith.addf %326, %329 : vector<32x64xf32>
    %cst_141 = arith.constant 0.000000e+00 : f32
    %331 = vector.broadcast %cst_141 : f32 to vector<32x64xf32>
    %332 = arith.maximumf %330, %331 : vector<32x64xf32>
    %333 = arith.truncf %332 : vector<32x64xf32> to vector<32x64xbf16>
    %c1_142 = arith.constant 1 : index
    %c0_143 = arith.constant 0 : index
    %c0_144 = arith.constant 0 : index
    %334 = vector.load %arg17[%c1_142, %c0_143, %c0_144] : memref<2x64x32xbf16, #tpu.memory_space<vmem>>, vector<1x64x32xbf16>
    %335 = vector.shape_cast %334 : vector<1x64x32xbf16> to vector<64x32xbf16>
    %cst_145 = arith.constant dense<0.000000e+00> : vector<32x32xf32>
    %336 = tpu.matmul %333, %335, %cst_145 {dimension_numbers = #tpu.dot_dimension_numbers<[1], [0], [0], [1], [0, 0, 1, 1], [], []>} : vector<32x64xbf16>, vector<64x32xbf16>, vector<32x32xf32> -> vector<32x32xf32>
    %c1_146 = arith.constant 1 : index
    %c0_147 = arith.constant 0 : index
    %c0_148 = arith.constant 0 : index
    %337 = vector.load %arg18[%c1_146, %c0_147, %c0_148] : memref<2x1x32xf32, #tpu.memory_space<vmem>>, vector<1x1x32xf32>
    %338 = vector.shape_cast %337 : vector<1x1x32xf32> to vector<1x32xf32>
    %339 = vector.broadcast %338 : vector<1x32xf32> to vector<32x32xf32>
    %340 = arith.addf %336, %339 : vector<32x32xf32>
    %341 = arith.addf %322, %340 : vector<32x32xf32>
    %c1_149 = arith.constant 1 : index
    %c0_150 = arith.constant 0 : index
    %c0_151 = arith.constant 0 : index
    %342 = vector.load %arg19[%c1_149, %c0_150, %c0_151] : memref<2x1x32xf32, #tpu.memory_space<vmem>>, vector<1x1x32xf32>
    %343 = vector.shape_cast %342 : vector<1x1x32xf32> to vector<1x32xf32>
    %c1_152 = arith.constant 1 : index
    %c0_153 = arith.constant 0 : index
    %c0_154 = arith.constant 0 : index
    %344 = vector.load %arg20[%c1_152, %c0_153, %c0_154] : memref<2x1x32xf32, #tpu.memory_space<vmem>>, vector<1x1x32xf32>
    %345 = vector.shape_cast %344 : vector<1x1x32xf32> to vector<1x32xf32>
    %cst_155 = arith.constant dense<0.000000e+00> : vector<32xf32>
    %346 = vector.multi_reduction <add>, %341, %cst_155 [1] : vector<32x32xf32> to vector<32xf32>
    %347 = vector.shape_cast %346 : vector<32xf32> to vector<32x1xf32>
    %cst_156 = arith.constant 3.200000e+01 : f32
    %348 = vector.broadcast %cst_156 : f32 to vector<32x1xf32>
    %349 = arith.divf %347, %348 : vector<32x1xf32>
    %350 = arith.mulf %341, %341 : vector<32x32xf32>
    %cst_157 = arith.constant dense<0.000000e+00> : vector<32xf32>
    %351 = vector.multi_reduction <add>, %350, %cst_157 [1] : vector<32x32xf32> to vector<32xf32>
    %352 = vector.shape_cast %351 : vector<32xf32> to vector<32x1xf32>
    %cst_158 = arith.constant 3.200000e+01 : f32
    %353 = vector.broadcast %cst_158 : f32 to vector<32x1xf32>
    %354 = arith.divf %352, %353 : vector<32x1xf32>
    %355 = arith.mulf %349, %349 : vector<32x1xf32>
    %356 = arith.subf %354, %355 : vector<32x1xf32>
    %cst_159 = arith.constant 0.000000e+00 : f32
    %357 = vector.broadcast %cst_159 : f32 to vector<32x1xf32>
    %358 = arith.maximumf %356, %357 : vector<32x1xf32>
    %359 = vector.broadcast %349 : vector<32x1xf32> to vector<32x32xf32>
    %360 = arith.subf %341, %359 : vector<32x32xf32>
    %cst_160 = arith.constant 9.99999974E-6 : f32
    %361 = vector.broadcast %cst_160 : f32 to vector<32x1xf32>
    %362 = arith.addf %358, %361 : vector<32x1xf32>
    %363 = math.rsqrt %362 : vector<32x1xf32>
    %364 = vector.broadcast %363 : vector<32x1xf32> to vector<32x32xf32>
    %365 = arith.mulf %360, %364 : vector<32x32xf32>
    %366 = vector.broadcast %343 : vector<1x32xf32> to vector<32x32xf32>
    %367 = arith.mulf %365, %366 : vector<32x32xf32>
    %368 = vector.broadcast %345 : vector<1x32xf32> to vector<32x32xf32>
    %369 = arith.addf %367, %368 : vector<32x32xf32>
    %c0_161 = arith.constant 0 : index
    %c0_162 = arith.constant 0 : index
    %370 = vector.load %arg21[%c0_161, %c0_162] : memref<32x32xf32, #tpu.memory_space<vmem>>, vector<32x32xf32>
    tpu.vector_store %arg21[%c0_161, %c0_162], %369 {strides = array<i32>} : memref<32x32xf32, #tpu.memory_space<vmem>>, vector<32x32xf32>,
    return
  }
}

</mosaic_0001>

<llo_original>
// kernel: transformer_encoder.1
$region0: #{transformer_encoder.1}
  #allocation0 [shape = 'u32[]', space=smem, size = 0x4, offset = 0x4, fixed_abs, tag = 'smem constant byte address 0x4 - core index']
  #allocation1 [shape = 'u32[144,128]{1,0:T(1,128)}', space=vmem, size = 0x12000, scoped, tag = 'internal scratch']
  %s0 = inlined_call_operand.vmem [shape: bf16[32,32], index: 0, kind: input, shape index: {}]
  %s1 = inlined_call_operand.vmem [shape: bf16[32,256], index: 1, kind: input, shape index: {}]
  %s2 = inlined_call_operand.vmem [shape: bf16[256,32], index: 2, kind: input, shape index: {}]
  %s3 = inlined_call_operand.vmem [shape: f32[1,32], index: 3, kind: input, shape index: {}]
  %s4 = inlined_call_operand.vmem [shape: f32[1,32], index: 4, kind: input, shape index: {}]
  %s5 = inlined_call_operand.vmem [shape: f32[1,32], index: 5, kind: input, shape index: {}]
  %s6 = inlined_call_operand.vmem [shape: bf16[128,32], index: 6, kind: input, shape index: {}]
  %s7 = inlined_call_operand.vmem [shape: f32[32,128], index: 7, kind: input, shape index: {}]
  %s8 = inlined_call_operand.vmem [shape: f32[4,128], index: 8, kind: input, shape index: {}]
  %s9 = inlined_call_operand.vmem [shape: bf16[2,32,96], index: 9, kind: input, shape index: {}]
  %s10 = inlined_call_operand.vmem [shape: f32[2,1,96], index: 10, kind: input, shape index: {}]
  %s11 = inlined_call_operand.vmem [shape: bf16[2,32,32], index: 11, kind: input, shape index: {}]
  %s12 = inlined_call_operand.vmem [shape: f32[2,1,32], index: 12, kind: input, shape index: {}]
  %s13 = inlined_call_operand.vmem [shape: f32[2,1,32], index: 13, kind: input, shape index: {}]
  %s14 = inlined_call_operand.vmem [shape: f32[2,1,32], index: 14, kind: input, shape index: {}]
  %s15 = inlined_call_operand.vmem [shape: bf16[2,32,64], index: 15, kind: input, shape index: {}]
  %s16 = inlined_call_operand.vmem [shape: f32[2,1,64], index: 16, kind: input, shape index: {}]
  %s17 = inlined_call_operand.vmem [shape: bf16[2,64,32], index: 17, kind: input, shape index: {}]
  %s18 = inlined_call_operand.vmem [shape: f32[2,1,32], index: 18, kind: input, shape index: {}]
  %s19 = inlined_call_operand.vmem [shape: f32[2,1,32], index: 19, kind: input, shape index: {}]
  %s20 = inlined_call_operand.vmem [shape: f32[2,1,32], index: 20, kind: input, shape index: {}]
  %s21 = inlined_call_operand.hbm [shape: f32[32,32], index: 21, kind: output, shape index: {}]
  %s22 = sld [smem:[#allocation0]]
  $region94: #{transformer_encoder.1} parent=0
    _
  %s24 = ssub.s32 1, %s22
  %s25 = scalar_select 0, %s24, %s22
  $region1: #{transformer_encoder.1} parent=0
    #allocation2 [shape = 'u8[16384]{0}', space=vmem, size = 0x4000, scoped, tag = 'output window, operand 0, single buffered']
    #allocation3 [shape = 's32[1]{0}', space=sflag, size = 0x4, scoped, tag = 'scoped memory for transformer_encoder.1']
    %26 = vsyncpa [#allocation3], 0
    // Predicated region
    $region2: #{transformer_encoder.1} parent=1 // pred_check
      _
    $region3: #{transformer_encoder.1} parent=1 // pred_check_branch
      %28 = sbr.rel (0) target = $region5
    $region4: #{transformer_encoder.1} parent=1 // pred_region
      _
    $region5: #{transformer_encoder.1} parent=1 // pred_fallthru
      _
    // Predicated region
    $region6: #{transformer_encoder.1} parent=1 // pred_check
      _
    $region7: #{transformer_encoder.1} parent=1 // pred_check_branch
      %30 = sbr.rel (0) target = $region9
    $region8: #{transformer_encoder.1} parent=1 // pred_region
      _
    $region9: #{transformer_encoder.1} parent=1 // pred_fallthru
      _
    // Predicated region
    $region10: #{transformer_encoder.1} parent=1 // pred_check
      _
    $region11: #{transformer_encoder.1} parent=1 // pred_check_branch
      %32 = sbr.rel (0) target = $region13
    $region12: #{transformer_encoder.1} parent=1 // pred_region
      _
    $region13: #{transformer_encoder.1} parent=1 // pred_fallthru
      _
    // Predicated region
    $region14: #{transformer_encoder.1} parent=1 // pred_check
      _
    $region15: #{transformer_encoder.1} parent=1 // pred_check_branch
      %34 = sbr.rel (0) target = $region17
    $region16: #{transformer_encoder.1} parent=1 // pred_region
      _
    $region17: #{transformer_encoder.1} parent=1 // pred_fallthru
      _
    // Predicated region
    $region18: #{transformer_encoder.1} parent=1 // pred_check
      _
    $region19: #{transformer_encoder.1} parent=1 // pred_check_branch
      %36 = sbr.rel (0) target = $region21
    $region20: #{transformer_encoder.1} parent=1 // pred_region
      _
    $region21: #{transformer_encoder.1} parent=1 // pred_fallthru
      _
    // Predicated region
    $region22: #{transformer_encoder.1} parent=1 // pred_check
      _
    $region23: #{transformer_encoder.1} parent=1 // pred_check_branch
      %38 = sbr.rel (0) target = $region25
    $region24: #{transformer_encoder.1} parent=1 // pred_region
      _
    $region25: #{transformer_encoder.1} parent=1 // pred_fallthru
      _
    // Predicated region
    $region26: #{transformer_encoder.1} parent=1 // pred_check
      _
    $region27: #{transformer_encoder.1} parent=1 // pred_check_branch
      %40 = sbr.rel (0) target = $region29
    $region28: #{transformer_encoder.1} parent=1 // pred_region
      _
    $region29: #{transformer_encoder.1} parent=1 // pred_fallthru
      _
    // Predicated region
    $region30: #{transformer_encoder.1} parent=1 // pred_check
      _
    $region31: #{transformer_encoder.1} parent=1 // pred_check_branch
      %42 = sbr.rel (0) target = $region33
    $region32: #{transformer_encoder.1} parent=1 // pred_region
      _
    $region33: #{transformer_encoder.1} parent=1 // pred_fallthru
      _
    // Predicated region
    $region34: #{transformer_encoder.1} parent=1 // pred_check
      _
    $region35: #{transformer_encoder.1} parent=1 // pred_check_branch
      %44 = sbr.rel (0) target = $region37
    $region36: #{transformer_encoder.1} parent=1 // pred_region
      _
    $region37: #{transformer_encoder.1} parent=1 // pred_fallthru
      _
    // Predicated region
    $region38: #{transformer_encoder.1} parent=1 // pred_check
      _
    $region39: #{transformer_encoder.1} parent=1 // pred_check_branch
      %46 = sbr.rel (0) target = $region41
    $region40: #{transformer_encoder.1} parent=1 // pred_region
      _
    $region41: #{transformer_encoder.1} parent=1 // pred_fallthru
      _
    // Predicated region
    $region42: #{transformer_encoder.1} parent=1 // pred_check
      _
    $region43: #{transformer_encoder.1} parent=1 // pred_check_branch
      %48 = sbr.rel (0) target = $region45
    $region44: #{transformer_encoder.1} parent=1 // pred_region
      _
    $region45: #{transformer_encoder.1} parent=1 // pred_fallthru
      _
    // Predicated region
    $region46: #{transformer_encoder.1} parent=1 // pred_check
      _
    $region47: #{transformer_encoder.1} parent=1 // pred_check_branch
      %50 = sbr.rel (0) target = $region49
    $region48: #{transformer_encoder.1} parent=1 // pred_region
      _
    $region49: #{transformer_encoder.1} parent=1 // pred_fallthru
      _
    // Predicated region
    $region50: #{transformer_encoder.1} parent=1 // pred_check
      _
    $region51: #{transformer_encoder.1} parent=1 // pred_check_branch
      %52 = sbr.rel (0) target = $region53
    $region52: #{transformer_encoder.1} parent=1 // pred_region
      _
    $region53: #{transformer_encoder.1} parent=1 // pred_fallthru
      _
    // Predicated region
    $region54: #{transformer_encoder.1} parent=1 // pred_check
      _
    $region55: #{transformer_encoder.1} parent=1 // pred_check_branch
      %54 = sbr.rel (0) target = $region57
    $region56: #{transformer_encoder.1} parent=1 // pred_region
      _
    $region57: #{transformer_encoder.1} parent=1 // pred_fallthru
      _
    // Predicated region
    $region58: #{transformer_encoder.1} parent=1 // pred_check
      _
    $region59: #{transformer_encoder.1} parent=1 // pred_check_branch
      %56 = sbr.rel (0) target = $region61
    $region60: #{transformer_encoder.1} parent=1 // pred_region
      _
    $region61: #{transformer_encoder.1} parent=1 // pred_fallthru
      _
    // Predicated region
    $region62: #{transformer_encoder.1} parent=1 // pred_check
      _
    $region63: #{transformer_encoder.1} parent=1 // pred_check_branch
      %58 = sbr.rel (0) target = $region65
    $region64: #{transformer_encoder.1} parent=1 // pred_region
      _
    $region65: #{transformer_encoder.1} parent=1 // pred_fallthru
      _
    // Predicated region
    $region66: #{transformer_encoder.1} parent=1 // pred_check
      _
    $region67: #{transformer_encoder.1} parent=1 // pred_check_branch
      %60 = sbr.rel (0) target = $region69
    $region68: #{transformer_encoder.1} parent=1 // pred_region
      _
    $region69: #{transformer_encoder.1} parent=1 // pred_fallthru
      _
    // Predicated region
    $region70: #{transformer_encoder.1} parent=1 // pred_check
      _
    $region71: #{transformer_encoder.1} parent=1 // pred_check_branch
      %62 = sbr.rel (0) target = $region73
    $region72: #{transformer_encoder.1} parent=1 // pred_region
      _
    $region73: #{transformer_encoder.1} parent=1 // pred_fallthru
      _
    // Predicated region
    $region74: #{transformer_encoder.1} parent=1 // pred_check
      _
    $region75: #{transformer_encoder.1} parent=1 // pred_check_branch
      %64 = sbr.rel (0) target = $region77
    $region76: #{transformer_encoder.1} parent=1 // pred_region
      _
    $region77: #{transformer_encoder.1} parent=1 // pred_fallthru
      _
    // Predicated region
    $region78: #{transformer_encoder.1} parent=1 // pred_check
      _
    $region79: #{transformer_encoder.1} parent=1 // pred_check_branch
      %66 = sbr.rel (0) target = $region81
    $region80: #{transformer_encoder.1} parent=1 // pred_region
      _
    $region81: #{transformer_encoder.1} parent=1 // pred_fallthru
      _
    // Predicated region
    $region82: #{transformer_encoder.1} parent=1 // pred_check
      _
    $region83: #{transformer_encoder.1} parent=1 // pred_check_branch
      %68 = sbr.rel (0) target = $region85
    $region84: #{transformer_encoder.1} parent=1 // pred_region
      _
    $region85: #{transformer_encoder.1} parent=1 // pred_fallthru
      _
    %v70 = vld [vmem:[%s6] sm:$0xf]
    %v71 = vld [vmem:[%s6 + $0x4] sm:$0xf]
    %v72 = vld [vmem:[%s6 + $0x8] sm:$0xf]
    %v73 = vld [vmem:[%s6 + $0xc] sm:$0xf]
    %v74 = vld [vmem:[%s6 + $0x10] sm:$0xf]
    %v75 = vld [vmem:[%s6 + $0x14] sm:$0xf]
    %v76 = vld [vmem:[%s6 + $0x18] sm:$0xf]
    %v77 = vld [vmem:[%s6 + $0x1c] sm:$0xf]
    %v78 = vld [vmem:[%s6 + $0x20] sm:$0xf]
    %v79 = vld [vmem:[%s6 + $0x24] sm:$0xf]
    %v80 = vld [vmem:[%s6 + $0x28] sm:$0xf]
    %v81 = vld [vmem:[%s6 + $0x2c] sm:$0xf]
    %v82 = vld [vmem:[%s6 + $0x30] sm:$0xf]
    %v83 = vld [vmem:[%s6 + $0x34] sm:$0xf]
    %v84 = vld [vmem:[%s6 + $0x38] sm:$0xf]
    %v85 = vld [vmem:[%s6 + $0x3c] sm:$0xf]
    %v86 = vld [vmem:[%s7] sm:$0xff]
    %v87 = vld [vmem:[%s7 + $0x8] sm:$0xff]
    %v88 = vld [vmem:[%s7 + $0x10] sm:$0xff]
    %v89 = vld [vmem:[%s7 + $0x18] sm:$0xff]
    %v90 = vld [vmem:[%s8] sm:$0xf]
    %v91 = vld [vmem:[%s0] sm:$0xf]
    %v92 = vld [vmem:[%s0 + $0x4] sm:$0xf]
    %v93 = vld [vmem:[%s0 + $0x8] sm:$0xf]
    %v94 = vld [vmem:[%s0 + $0xc] sm:$0xf]
    %v95 = vunpack.c.l.bf16 %v91
    %v96 = vunpack.c.l.bf16 %v92
    %v97 = vunpack.c.l.bf16 %v93
    %v98 = vunpack.c.l.bf16 %v94
    %v99 = vld [vmem:[%s1] sm:$0xff]
    %v100 = vld [vmem:[%s1 + $0x8] sm:$0xff]
    %v101 = vld [vmem:[%s1 + $0x10] sm:$0xff]
    %v102 = vld [vmem:[%s1 + $0x18] sm:$0xff]
    %v103 = vld [vmem:[%s2] sm:$0xf]
    %v104 = vld [vmem:[%s2 + $0x4] sm:$0xf]
    %v105 = vld [vmem:[%s2 + $0x8] sm:$0xf]
    %v106 = vld [vmem:[%s2 + $0xc] sm:$0xf]
    %v107 = vld [vmem:[%s2 + $0x10] sm:$0xf]
    %v108 = vld [vmem:[%s2 + $0x14] sm:$0xf]
    %v109 = vld [vmem:[%s2 + $0x18] sm:$0xf]
    %v110 = vld [vmem:[%s2 + $0x1c] sm:$0xf]
    %v111 = vld [vmem:[%s2 + $0x20] sm:$0xf]
    %v112 = vld [vmem:[%s2 + $0x24] sm:$0xf]
    %v113 = vld [vmem:[%s2 + $0x28] sm:$0xf]
    %v114 = vld [vmem:[%s2 + $0x2c] sm:$0xf]
    %v115 = vld [vmem:[%s2 + $0x30] sm:$0xf]
    %v116 = vld [vmem:[%s2 + $0x34] sm:$0xf]
    %v117 = vld [vmem:[%s2 + $0x38] sm:$0xf]
    %v118 = vld [vmem:[%s2 + $0x3c] sm:$0xf]
    %v119 = vld [vmem:[%s2 + $0x40] sm:$0xf]
    %v120 = vld [vmem:[%s2 + $0x44] sm:$0xf]
    %v121 = vld [vmem:[%s2 + $0x48] sm:$0xf]
    %v122 = vld [vmem:[%s2 + $0x4c] sm:$0xf]
    %v123 = vld [vmem:[%s2 + $0x50] sm:$0xf]
    %v124 = vld [vmem:[%s2 + $0x54] sm:$0xf]
    %v125 = vld [vmem:[%s2 + $0x58] sm:$0xf]
    %v126 = vld [vmem:[%s2 + $0x5c] sm:$0xf]
    %v127 = vld [vmem:[%s2 + $0x60] sm:$0xf]
    %v128 = vld [vmem:[%s2 + $0x64] sm:$0xf]
    %v129 = vld [vmem:[%s2 + $0x68] sm:$0xf]
    %v130 = vld [vmem:[%s2 + $0x6c] sm:$0xf]
    %v131 = vld [vmem:[%s2 + $0x70] sm:$0xf]
    %v132 = vld [vmem:[%s2 + $0x74] sm:$0xf]
    %v133 = vld [vmem:[%s2 + $0x78] sm:$0xf]
    %v134 = vld [vmem:[%s2 + $0x7c] sm:$0xf]
    %v135 = vld [vmem:[%s3] sm:$0x1]
    %v137 = vlaneseq
    %v138 = vshrl.u32 %v137, 7
    %v139 = vsub.s32 0, %v138
    %v140 = vrot.slane %v135, %v139
    %v146 = vunpack.c.l.b16 %v99
    %v147 = vunpack.c.h.b16 %v99
    %v148 = vunpack.c.l.b16 %v100
    %v149 = vunpack.c.h.b16 %v100
    %v150 = vunpack.c.l.b16 %v101
    %v151 = vunpack.c.h.b16 %v101
    %v152 = vunpack.c.l.b16 %v102
    %v153 = vunpack.c.h.b16 %v102
    %v154 = vpack.c.b16 %v148, %v146
    %v155 = vpack.c.b16 %v149, %v147
    %v156 = vpack.c.b16 %v152, %v150
    %v157 = vpack.c.b16 %v153, %v151
    %v194 = vunpack.c.l.b16 %v103
    %v195 = vunpack.c.l.b16 %v104
    %v196 = vunpack.c.l.b16 %v105
    %v197 = vunpack.c.l.b16 %v106
    %v198 = vunpack.c.l.b16 %v107
    %v199 = vunpack.c.l.b16 %v108
    %v200 = vunpack.c.l.b16 %v109
    %v201 = vunpack.c.l.b16 %v110
    %v202 = vunpack.c.l.b16 %v111
    %v203 = vunpack.c.l.b16 %v112
    %v204 = vunpack.c.l.b16 %v113
    %v205 = vunpack.c.l.b16 %v114
    %v206 = vunpack.c.l.b16 %v115
    %v207 = vunpack.c.l.b16 %v116
    %v208 = vunpack.c.l.b16 %v117
    %v209 = vunpack.c.l.b16 %v118
    %v210 = vunpack.c.l.b16 %v119
    %v211 = vunpack.c.l.b16 %v120
    %v212 = vunpack.c.l.b16 %v121
    %v213 = vunpack.c.l.b16 %v122
    %v214 = vunpack.c.l.b16 %v123
    %v215 = vunpack.c.l.b16 %v124
    %v216 = vunpack.c.l.b16 %v125
    %v217 = vunpack.c.l.b16 %v126
    %v218 = vunpack.c.l.b16 %v127
    %v219 = vunpack.c.l.b16 %v128
    %v220 = vunpack.c.l.b16 %v129
    %v221 = vunpack.c.l.b16 %v130
    %v222 = vunpack.c.l.b16 %v131
    %v223 = vunpack.c.l.b16 %v132
    %v224 = vunpack.c.l.b16 %v133
    %v225 = vunpack.c.l.b16 %v134
    %v226 = vpack.c.b16 %v195, %v194
    %v227 = vpack.c.b16 %v197, %v196
    %v228 = vpack.c.b16 %v199, %v198
    %v229 = vpack.c.b16 %v201, %v200
    %v230 = vpack.c.b16 %v203, %v202
    %v231 = vpack.c.b16 %v205, %v204
    %v232 = vpack.c.b16 %v207, %v206
    %v233 = vpack.c.b16 %v209, %v208
    %v234 = vpack.c.b16 %v211, %v210
    %v235 = vpack.c.b16 %v213, %v212
    %v236 = vpack.c.b16 %v215, %v214
    %v237 = vpack.c.b16 %v217, %v216
    %v238 = vpack.c.b16 %v219, %v218
    %v239 = vpack.c.b16 %v221, %v220
    %v240 = vpack.c.b16 %v223, %v222
    %v241 = vpack.c.b16 %v225, %v224
    %258 = vmatprep.subr.bf16.mxu0 0
    %259 = vmatpush1.bf16.msra.mxu0 %v226
    %260 = vmatprep.subr.bf16.mxu0 0
    %261 = vmatpush1.bf16.msra.mxu0 %v227
    %262 = vmatprep.subr.bf16.mxu0 0
    %263 = vmatpush1.bf16.msra.mxu0 %v228
    %264 = vmatprep.subr.bf16.mxu0 0
    %265 = vmatpush1.bf16.msra.mxu0 %v229
    %266 = vmatprep.subr.bf16.mxu0 0
    %267 = vmatpush1.bf16.msra.mxu0 %v230
    %268 = vmatprep.subr.bf16.mxu0 0
    %269 = vmatpush1.bf16.msra.mxu0 %v231
    %270 = vmatprep.subr.bf16.mxu0 0
    %271 = vmatpush1.bf16.msra.mxu0 %v232
    %272 = vmatprep.subr.bf16.mxu0 0
    %273 = vmatpush1.bf16.msra.mxu0 %v233
    %274 = vmatprep.subr.bf16.mxu0 0
    %275 = vmatpush1.bf16.msra.mxu0 %v234
    %276 = vmatprep.subr.bf16.mxu0 0
    %277 = vmatpush1.bf16.msra.mxu0 %v235
    %278 = vmatprep.subr.bf16.mxu0 0
    %279 = vmatpush1.bf16.msra.mxu0 %v236
    %280 = vmatprep.subr.bf16.mxu0 0
    %281 = vmatpush1.bf16.msra.mxu0 %v237
    %282 = vmatprep.subr.bf16.mxu0 0
    %283 = vmatpush1.bf16.msra.mxu0 %v238
    %284 = vmatprep.subr.bf16.mxu0 0
    %285 = vmatpush1.bf16.msra.mxu0 %v239
    %286 = vmatprep.subr.bf16.mxu0 0
    %287 = vmatpush1.bf16.msra.mxu0 %v240
    %288 = vmatprep.subr.bf16.mxu0 0
    %289 = vmatpush1.bf16.msra.mxu0 %v241
    %290 = vmatprep.mubr.bf16.mxu0 %v155
    %291 = vmatmul.mubr.bf16.gmra.mrb[0].mxu0 %v154
    %v292 = vpop.f32.mrb[0].mxu0
    %v293 = vadd.f32 %v140, %v292
    %v294 = vpop.f32.mrb[0].mxu0
    %v295 = vpop.f32.mrb[0].mxu0
    %v296 = vadd.f32 %v140, %v295
    %v297 = vpop.f32.mrb[0].mxu0
    %298 = vmatprep.mubr.bf16.mxu0 %v157
    %299 = vmatmul.mubr.bf16.gmra.mrb[0].mxu0 %v156
    %v300 = vpop.f32.mrb[0].mxu0
    %v301 = vadd.f32 %v140, %v300
    %v302 = vpop.f32.mrb[0].mxu0
    %v303 = vpop.f32.mrb[0].mxu0
    %v304 = vadd.f32 %v140, %v303
    %v305 = vpop.f32.mrb[0].mxu0
    %306 = vdwg.mxu0
    %v307 = vmul.f32 %v293, 0.5
    %v308 = vmul.f32 %v296, 0.5
    %v309 = vmul.f32 %v301, 0.5
    %v310 = vmul.f32 %v304, 0.5
    %v311 = vmul.f32 %v293, 0.70710677
    %v312 = vmul.f32 %v296, 0.70710677
    %v313 = vmul.f32 %v301, 0.70710677
    %v314 = vmul.f32 %v304, 0.70710677
    %v315 = verf.f32.pop %v311
    %v316 = verf.f32.pop %v312
    %v317 = verf.f32.pop %v313
    %v318 = verf.f32.pop %v314
    %v319 = vadd.f32 %v315, 1.0
    %v320 = vadd.f32 %v316, 1.0
    %v321 = vadd.f32 %v317, 1.0
    %v322 = vadd.f32 %v318, 1.0
    %v323 = vmul.f32 %v307, %v319
    %v324 = vmul.f32 %v308, %v320
    %v325 = vmul.f32 %v309, %v321
    %v326 = vmul.f32 %v310, %v322
    %v327 = vadd.f32 %v95, %v323
    %v328 = vadd.f32 %v96, %v324
    %v329 = vadd.f32 %v97, %v325
    %v330 = vadd.f32 %v98, %v326
    %v331 = vld [vmem:[%s4] sm:$0x1]
    %v332 = vld [vmem:[%s5] sm:$0x1]
    %vm333 = vcmask 261120
    %v334 = vsel %vm333, %v327, 0.0
    %335 = vadd.xlane.f32.xlu0 %v334
    %v336 = vpop.xlane.xlu0 %335
    %v337 = vsel %vm333, %v328, 0.0
    %338 = vadd.xlane.f32.xlu0 %v337
    %v339 = vpop.xlane.xlu0 %338
    %v340 = vsel %vm333, %v329, 0.0
    %341 = vadd.xlane.f32.xlu0 %v340
    %v342 = vpop.xlane.xlu0 %341
    %v343 = vsel %vm333, %v330, 0.0
    %344 = vadd.xlane.f32.xlu0 %v343
    %v345 = vpop.xlane.xlu0 %344
    %v346 = vrcp.pop 32.0
    %v347 = vmul.f32 %v336, %v346
    %v348 = vmul.f32 %v339, %v346
    %v349 = vmul.f32 %v342, %v346
    %v350 = vmul.f32 %v345, %v346
    %v351 = vmul.f32 %v327, %v327
    %v352 = vmul.f32 %v328, %v328
    %v353 = vmul.f32 %v329, %v329
    %v354 = vmul.f32 %v330, %v330
    %v355 = vsel %vm333, %v351, 0.0
    %356 = vadd.xlane.f32.xlu0 %v355
    %v357 = vpop.xlane.xlu0 %356
    %v358 = vsel %vm333, %v352, 0.0
    %359 = vadd.xlane.f32.xlu0 %v358
    %v360 = vpop.xlane.xlu0 %359
    %v361 = vsel %vm333, %v353, 0.0
    %362 = vadd.xlane.f32.xlu0 %v361
    %v363 = vpop.xlane.xlu0 %362
    %v364 = vsel %vm333, %v354, 0.0
    %365 = vadd.xlane.f32.xlu0 %v364
    %v366 = vpop.xlane.xlu0 %365
    %v367 = vmul.f32 %v357, %v346
    %v368 = vmul.f32 %v360, %v346
    %v369 = vmul.f32 %v363, %v346
    %v370 = vmul.f32 %v366, %v346
    %v371 = vmul.f32 %v347, %v347
    %v372 = vmul.f32 %v348, %v348
    %v373 = vmul.f32 %v349, %v349
    %v374 = vmul.f32 %v350, %v350
    %v375 = vsub.f32 %v367, %v371
    %v376 = vsub.f32 %v368, %v372
    %v377 = vsub.f32 %v369, %v373
    %v378 = vsub.f32 %v370, %v374
    %v379 = vmax.f32 %v375, 0.0
    %v380 = vmax.f32 %v376, 0.0
    %v381 = vmax.f32 %v377, 0.0
    %v382 = vmax.f32 %v378, 0.0
    %v383 = vsub.f32 %v327, %v347
    %v384 = vsub.f32 %v328, %v348
    %v385 = vsub.f32 %v329, %v349
    %v386 = vsub.f32 %v330, %v350
    %v387 = vadd.f32 %v379, 1e-05
    %v388 = vadd.f32 %v380, 1e-05
    %v389 = vadd.f32 %v381, 1e-05
    %v390 = vadd.f32 %v382, 1e-05
    %v391 = vrsqrt.pop %v387
    %v392 = vrsqrt.pop %v388
    %v393 = vrsqrt.pop %v389
    %v394 = vrsqrt.pop %v390
    %v395 = vmul.f32 %v383, %v391
    %v396 = vmul.f32 %v384, %v392
    %v397 = vmul.f32 %v385, %v393
    %v398 = vmul.f32 %v386, %v394
    %v400 = vlaneseq
    %v401 = vshrl.u32 %v400, 7
    %v402 = vsub.s32 0, %v401
    %v403 = vrot.slane %v331, %v402
    %v405 = vmul.f32 %v395, %v403
    %v406 = vmul.f32 %v396, %v403
    %v407 = vmul.f32 %v397, %v403
    %v408 = vmul.f32 %v398, %v403
    %v410 = vlaneseq
    %v411 = vshrl.u32 %v410, 7
    %v412 = vsub.s32 0, %v411
    %v413 = vrot.slane %v332, %v412
    %v415 = vadd.f32 %v405, %v413
    %v416 = vadd.f32 %v406, %v413
    %v417 = vadd.f32 %v407, %v413
    %v418 = vadd.f32 %v408, %v413
    %v419 = vpack.c.bf16 %v416, %v415
    %v420 = vpack.c.bf16 %v418, %v417
    %v421 = vld [vmem:[%s9] sm:$0xf]
    %v422 = vld [vmem:[%s9 + $0x4] sm:$0xf]
    %v423 = vld [vmem:[%s9 + $0x8] sm:$0xf]
    %v424 = vld [vmem:[%s9 + $0xc] sm:$0xf]
    %v425 = vld [vmem:[%s10] sm:$0x1]
    %v427 = vlaneseq
    %v428 = vshrl.u32 %v427, 7
    %v429 = vsub.s32 0, %v428
    %v430 = vrot.slane %v425, %v429
    %v436 = vunpack.c.l.b16 %v421
    %v437 = vunpack.c.l.b16 %v422
    %v438 = vunpack.c.l.b16 %v423
    %v439 = vunpack.c.l.b16 %v424
    %v440 = vpack.c.b16 %v437, %v436
    %v441 = vpack.c.b16 %v439, %v438
    %v445 = vsel %vm333, %v419, 0
    %v448 = vsel %vm333, %v420, 0
    %450 = vmatprep.subr.bf16.mxu0 0
    %451 = vmatpush1.bf16.msra.mxu0 %v440
    %452 = vmatprep.subr.bf16.mxu0 0
    %453 = vmatpush1.bf16.msra.mxu0 %v441
    %454 = vmatprep.subr.bf16.mxu0 0
    %455 = vmatpush1.bf16.msra.mxu0 0
    %456 = vmatprep.subr.bf16.mxu0 0
    %457 = vmatpush1.bf16.msra.mxu0 0
    %458 = vmatprep.subr.bf16.mxu0 0
    %459 = vmatpush1.bf16.msra.mxu0 0
    %460 = vmatprep.subr.bf16.mxu0 0
    %461 = vmatpush1.bf16.msra.mxu0 0
    %462 = vmatprep.subr.bf16.mxu0 0
    %463 = vmatpush1.bf16.msra.mxu0 0
    %464 = vmatprep.subr.bf16.mxu0 0
    %465 = vmatpush1.bf16.msra.mxu0 0
    %466 = vmatprep.subr.bf16.mxu0 0
    %467 = vmatpush1.bf16.msra.mxu0 0
    %468 = vmatprep.subr.bf16.mxu0 0
    %469 = vmatpush1.bf16.msra.mxu0 0
    %470 = vmatprep.subr.bf16.mxu0 0
    %471 = vmatpush1.bf16.msra.mxu0 0
    %472 = vmatprep.subr.bf16.mxu0 0
    %473 = vmatpush1.bf16.msra.mxu0 0
    %474 = vmatprep.subr.bf16.mxu0 0
    %475 = vmatpush1.bf16.msra.mxu0 0
    %476 = vmatprep.subr.bf16.mxu0 0
    %477 = vmatpush1.bf16.msra.mxu0 0
    %478 = vmatprep.subr.bf16.mxu0 0
    %479 = vmatpush1.bf16.msra.mxu0 0
    %480 = vmatprep.subr.bf16.mxu0 0
    %481 = vmatpush1.bf16.msra.mxu0 0
    %482 = vmatprep.mubr.bf16.mxu0 0
    %483 = vmatmul.mubr.bf16.gmra.mrb[0].mxu0 %v445
    %v484 = vpop.f32.mrb[0].mxu0
    %v485 = vadd.f32 %v430, %v484
    %v486 = vpop.f32.mrb[0].mxu0
    %v487 = vpop.f32.mrb[0].mxu0
    %v488 = vadd.f32 %v430, %v487
    %v489 = vpop.f32.mrb[0].mxu0
    %490 = vmatprep.mubr.bf16.mxu0 0
    %491 = vmatmul.mubr.bf16.gmra.mrb[0].mxu0 %v448
    %v492 = vpop.f32.mrb[0].mxu0
    %v493 = vadd.f32 %v430, %v492
    %v494 = vpop.f32.mrb[0].mxu0
    %v495 = vpop.f32.mrb[0].mxu0
    %v496 = vadd.f32 %v430, %v495
    %v497 = vpop.f32.mrb[0].mxu0
    %498 = vdwg.mxu0
    %v499 = vpack.c.bf16 %v488, %v485
    %v500 = vpack.c.bf16 %v496, %v493
    %v517 = vunpack.c.l.b16 %v70
    %v518 = vunpack.c.l.b16 %v71
    %v519 = vunpack.c.l.b16 %v72
    %v520 = vunpack.c.l.b16 %v73
    %v521 = vunpack.c.l.b16 %v74
    %v522 = vunpack.c.l.b16 %v75
    %v523 = vunpack.c.l.b16 %v76
    %v524 = vunpack.c.l.b16 %v77
    %v525 = vunpack.c.l.b16 %v78
    %v526 = vunpack.c.l.b16 %v79
    %v527 = vunpack.c.l.b16 %v80
    %v528 = vunpack.c.l.b16 %v81
    %v529 = vunpack.c.l.b16 %v82
    %v530 = vunpack.c.l.b16 %v83
    %v531 = vunpack.c.l.b16 %v84
    %v532 = vunpack.c.l.b16 %v85
    %v533 = vpack.c.b16 %v518, %v517
    %v534 = vpack.c.b16 %v520, %v519
    %v535 = vpack.c.b16 %v522, %v521
    %v536 = vpack.c.b16 %v524, %v523
    %v537 = vpack.c.b16 %v526, %v525
    %v538 = vpack.c.b16 %v528, %v527
    %v539 = vpack.c.b16 %v530, %v529
    %v540 = vpack.c.b16 %v532, %v531
    %541 = vrot.lane.b32.xlu0 %v533, 32
    %v542 = vpop.permute.xlu0 %541
    %543 = vrot.lane.b32.xlu0 %v534, 32
    %v544 = vpop.permute.xlu0 %543
    %545 = vrot.lane.b32.xlu0 %v535, 32
    %v546 = vpop.permute.xlu0 %545
    %547 = vrot.lane.b32.xlu0 %v536, 32
    %v548 = vpop.permute.xlu0 %547
    %549 = vrot.lane.b32.xlu0 %v537, 32
    %v550 = vpop.permute.xlu0 %549
    %551 = vrot.lane.b32.xlu0 %v538, 32
    %v552 = vpop.permute.xlu0 %551
    %553 = vrot.lane.b32.xlu0 %v539, 32
    %v554 = vpop.permute.xlu0 %553
    %555 = vrot.lane.b32.xlu0 %v540, 32
    %v556 = vpop.permute.xlu0 %555
    %v565 = vmul.bf16 %v499, %v542
    %v566 = vmul.bf16 %v500, %v544
    %v567 = vmul.bf16 %v499, %v546
    %v568 = vmul.bf16 %v500, %v548
    %v569 = vmul.bf16 %v499, %v550
    %v570 = vmul.bf16 %v500, %v552
    %v571 = vmul.bf16 %v499, %v554
    %v572 = vmul.bf16 %v500, %v556
    %573 = vrot.lane.b32.xlu0 %v533, 64
    %v574 = vpop.permute.xlu0 %573
    %575 = vrot.lane.b32.xlu0 %v534, 64
    %v576 = vpop.permute.xlu0 %575
    %577 = vrot.lane.b32.xlu0 %v535, 64
    %v578 = vpop.permute.xlu0 %577
    %579 = vrot.lane.b32.xlu0 %v536, 64
    %v580 = vpop.permute.xlu0 %579
    %581 = vrot.lane.b32.xlu0 %v537, 64
    %v582 = vpop.permute.xlu0 %581
    %583 = vrot.lane.b32.xlu0 %v538, 64
    %v584 = vpop.permute.xlu0 %583
    %585 = vrot.lane.b32.xlu0 %v539, 64
    %v586 = vpop.permute.xlu0 %585
    %587 = vrot.lane.b32.xlu0 %v540, 64
    %v588 = vpop.permute.xlu0 %587
    %v597 = vmul.bf16 %v499, %v574
    %v598 = vmul.bf16 %v500, %v576
    %v599 = vmul.bf16 %v499, %v578
    %v600 = vmul.bf16 %v500, %v580
    %v601 = vmul.bf16 %v499, %v582
    %v602 = vmul.bf16 %v500, %v584
    %v603 = vmul.bf16 %v499, %v586
    %v604 = vmul.bf16 %v500, %v588
    %613 = vrot.lane.b32.xlu0 %v565, 96
    %v614 = vpop.permute.xlu0 %613
    %615 = vrot.lane.b32.xlu0 %v566, 96
    %v616 = vpop.permute.xlu0 %615
    %617 = vrot.lane.b32.xlu0 %v567, 96
    %v618 = vpop.permute.xlu0 %617
    %619 = vrot.lane.b32.xlu0 %v568, 96
    %v620 = vpop.permute.xlu0 %619
    %621 = vrot.lane.b32.xlu0 %v569, 96
    %v622 = vpop.permute.xlu0 %621
    %623 = vrot.lane.b32.xlu0 %v570, 96
    %v624 = vpop.permute.xlu0 %623
    %625 = vrot.lane.b32.xlu0 %v571, 96
    %v626 = vpop.permute.xlu0 %625
    %627 = vrot.lane.b32.xlu0 %v572, 96
    %v628 = vpop.permute.xlu0 %627
    %v630 = vsel %vm333, %v499, 0
    %v633 = vsel %vm333, %v500, 0
    %v636 = vsel %vm333, %v614, 0
    %v639 = vsel %vm333, %v616, 0
    %v642 = vsel %vm333, %v618, 0
    %v645 = vsel %vm333, %v620, 0
    %v648 = vsel %vm333, %v622, 0
    %v651 = vsel %vm333, %v624, 0
    %v654 = vsel %vm333, %v626, 0
    %v657 = vsel %vm333, %v628, 0
    %659 = vmatprep.subr.bf16.mxu0 0
    %660 = vmatpush1.bf16.xpose.msra.mxu0 %v636
    %661 = vmatprep.subr.bf16.mxu0 0
    %662 = vmatpush1.bf16.xpose.msra.mxu0 %v639
    %663 = vmatprep.subr.bf16.mxu0 0
    %664 = vmatpush1.bf16.xpose.msra.mxu0 %v642
    %665 = vmatprep.subr.bf16.mxu0 0
    %666 = vmatpush1.bf16.xpose.msra.mxu0 %v645
    %667 = vmatprep.subr.bf16.mxu0 0
    %668 = vmatpush1.bf16.xpose.msra.mxu0 %v648
    %669 = vmatprep.subr.bf16.mxu0 0
    %670 = vmatpush1.bf16.xpose.msra.mxu0 %v651
    %671 = vmatprep.subr.bf16.mxu0 0
    %672 = vmatpush1.bf16.xpose.msra.mxu0 %v654
    %673 = vmatprep.subr.bf16.mxu0 0
    %674 = vmatpush1.bf16.xpose.msra.mxu0 %v657
    %675 = vmatprep.subr.bf16.mxu0 0
    %676 = vmatpush1.bf16.xpose.msra.mxu0 0
    %677 = vmatprep.subr.bf16.mxu0 0
    %678 = vmatpush1.bf16.xpose.msra.mxu0 0
    %679 = vmatprep.subr.bf16.mxu0 0
    %680 = vmatpush1.bf16.xpose.msra.mxu0 0
    %681 = vmatprep.subr.bf16.mxu0 0
    %682 = vmatpush1.bf16.xpose.msra.mxu0 0
    %683 = vmatprep.subr.bf16.mxu0 0
    %684 = vmatpush1.bf16.xpose.msra.mxu0 0
    %685 = vmatprep.subr.bf16.mxu0 0
    %686 = vmatpush1.bf16.xpose.msra.mxu0 0
    %687 = vmatprep.subr.bf16.mxu0 0
    %688 = vmatpush1.bf16.xpose.msra.mxu0 0
    %689 = vmatprep.subr.bf16.mxu0 0
    %690 = vmatpush1.bf16.xpose.msra.mxu0 0
    %691 = vmatprep.mubr.bf16.mxu0 0
    %692 = vmatmul.mubr.bf16.gmra.mrb[0].mxu0 %v630
    %v693 = vpop.f32.mrb[0].mxu0
    %v694 = vadd.f32 %v86, %v693
    %v695 = vpop.f32.mrb[0].mxu0
    %v696 = vpop.f32.mrb[0].mxu0
    %v697 = vadd.f32 %v87, %v696
    %v698 = vpop.f32.mrb[0].mxu0
    %699 = vmatprep.mubr.bf16.mxu0 0
    %700 = vmatmul.mubr.bf16.gmra.mrb[0].mxu0 %v633
    %v701 = vpop.f32.mrb[0].mxu0
    %v702 = vadd.f32 %v88, %v701
    %v703 = vpop.f32.mrb[0].mxu0
    %v704 = vpop.f32.mrb[0].mxu0
    %v705 = vadd.f32 %v89, %v704
    %v706 = vpop.f32.mrb[0].mxu0
    %707 = vdwg.mxu0
    %vm708 = vcmp.gt.f32.partialorder %v90, 0.5
    %v709 = vsel %vm708, 1, 0
    %v710 = vlaneseq
    %v711 = vshrl.u32 %v710, 7
    %v712 = vsub.s32 0, %v711
    %v713 = vrot.slane %v709, %v712
    %vm714 = vcmp.eq.s32.totalorder %v713, 1
    %v715 = vsel %vm714, %v694, -1e+30
    %v716 = vsel %vm714, %v697, -1e+30
    %v717 = vsel %vm714, %v702, -1e+30
    %v718 = vsel %vm714, %v705, -1e+30
    %719 = vmax.xlane.f32.xlu0 %v715
    %v720 = vpop.xlane.xlu0 %719
    %721 = vmax.xlane.f32.xlu0 %v716
    %v722 = vpop.xlane.xlu0 %721
    %723 = vmax.xlane.f32.xlu0 %v717
    %v724 = vpop.xlane.xlu0 %723
    %725 = vmax.xlane.f32.xlu0 %v718
    %v726 = vpop.xlane.xlu0 %725
    %v727 = vlaneseq
    %v728 = vshrl.u32 %v727, 7
    %v729 = vsub.s32 0, %v728
    %v730 = vrot.slane %v90, %v729
    %v731 = vmul.f32 %v720, %v730
    %v732 = vmul.f32 %v722, %v730
    %v733 = vmul.f32 %v724, %v730
    %v734 = vmul.f32 %v726, %v730
    %v735 = vlaneseq
    %v736 = vshrl.u32 %v735, 7
    %v737 = vsub.s32 1, %v736
    %v738 = vrot.slane %v709, %v737
    %vm739 = vcmp.eq.s32.totalorder %v738, 1
    %v740 = vsel %vm739, %v694, -1e+30
    %v741 = vsel %vm739, %v697, -1e+30
    %v742 = vsel %vm739, %v702, -1e+30
    %v743 = vsel %vm739, %v705, -1e+30
    %744 = vmax.xlane.f32.xlu0 %v740
    %v745 = vpop.xlane.xlu0 %744
    %746 = vmax.xlane.f32.xlu0 %v741
    %v747 = vpop.xlane.xlu0 %746
    %748 = vmax.xlane.f32.xlu0 %v742
    %v749 = vpop.xlane.xlu0 %748
    %750 = vmax.xlane.f32.xlu0 %v743
    %v751 = vpop.xlane.xlu0 %750
    %v752 = vlaneseq
    %v753 = vshrl.u32 %v752, 7
    %v754 = vsub.s32 1, %v753
    %v755 = vrot.slane %v90, %v754
    %v756 = vmul.f32 %v745, %v755
    %v757 = vmul.f32 %v747, %v755
    %v758 = vmul.f32 %v749, %v755
    %v759 = vmul.f32 %v751, %v755
    %v760 = vadd.f32 %v731, %v756
    %v761 = vadd.f32 %v732, %v757
    %v762 = vadd.f32 %v733, %v758
    %v763 = vadd.f32 %v734, %v759
    %v764 = vlaneseq
    %v765 = vshrl.u32 %v764, 7
    %v766 = vsub.s32 2, %v765
    %v767 = vrot.slane %v709, %v766
    %vm768 = vcmp.eq.s32.totalorder %v767, 1
    %v769 = vsel %vm768, %v694, -1e+30
    %v770 = vsel %vm768, %v697, -1e+30
    %v771 = vsel %vm768, %v702, -1e+30
    %v772 = vsel %vm768, %v705, -1e+30
    %773 = vmax.xlane.f32.xlu0 %v769
    %v774 = vpop.xlane.xlu0 %773
    %775 = vmax.xlane.f32.xlu0 %v770
    %v776 = vpop.xlane.xlu0 %775
    %777 = vmax.xlane.f32.xlu0 %v771
    %v778 = vpop.xlane.xlu0 %777
    %779 = vmax.xlane.f32.xlu0 %v772
    %v780 = vpop.xlane.xlu0 %779
    %v781 = vlaneseq
    %v782 = vshrl.u32 %v781, 7
    %v783 = vsub.s32 2, %v782
    %v784 = vrot.slane %v90, %v783
    %v785 = vmul.f32 %v774, %v784
    %v786 = vmul.f32 %v776, %v784
    %v787 = vmul.f32 %v778, %v784
    %v788 = vmul.f32 %v780, %v784
    %v789 = vadd.f32 %v760, %v785
    %v790 = vadd.f32 %v761, %v786
    %v791 = vadd.f32 %v762, %v787
    %v792 = vadd.f32 %v763, %v788
    %v793 = vlaneseq
    %v794 = vshrl.u32 %v793, 7
    %v795 = vsub.s32 3, %v794
    %v796 = vrot.slane %v709, %v795
    %vm797 = vcmp.eq.s32.totalorder %v796, 1
    %v798 = vsel %vm797, %v694, -1e+30
    %v799 = vsel %vm797, %v697, -1e+30
    %v800 = vsel %vm797, %v702, -1e+30
    %v801 = vsel %vm797, %v705, -1e+30
    %802 = vmax.xlane.f32.xlu0 %v798
    %v803 = vpop.xlane.xlu0 %802
    %804 = vmax.xlane.f32.xlu0 %v799
    %v805 = vpop.xlane.xlu0 %804
    %806 = vmax.xlane.f32.xlu0 %v800
    %v807 = vpop.xlane.xlu0 %806
    %808 = vmax.xlane.f32.xlu0 %v801
    %v809 = vpop.xlane.xlu0 %808
    %v810 = vlaneseq
    %v811 = vshrl.u32 %v810, 7
    %v812 = vsub.s32 3, %v811
    %v813 = vrot.slane %v90, %v812
    %v814 = vmul.f32 %v803, %v813
    %v815 = vmul.f32 %v805, %v813
    %v816 = vmul.f32 %v807, %v813
    %v817 = vmul.f32 %v809, %v813
    %v818 = vadd.f32 %v789, %v814
    %v819 = vadd.f32 %v790, %v815
    %v820 = vadd.f32 %v791, %v816
    %v821 = vadd.f32 %v792, %v817
    %v822 = vsub.f32 %v694, %v818
    %v823 = vsub.f32 %v697, %v819
    %v824 = vsub.f32 %v702, %v820
    %v825 = vsub.f32 %v705, %v821
    %v826 = vmul.f32 %v822, 1.442695
    %v827 = vpow.pop %v826
    %v828 = vmul.f32 %v823, 1.442695
    %v829 = vpow.pop %v828
    %v830 = vmul.f32 %v824, 1.442695
    %v831 = vpow.pop %v830
    %v832 = vmul.f32 %v825, 1.442695
    %v833 = vpow.pop %v832
    %v834 = vpack.c.bf16 %v829, %v827
    %v835 = vpack.c.bf16 %v833, %v831
    %844 = vrot.lane.b32.xlu0 %v597, 64
    %v845 = vpop.permute.xlu0 %844
    %846 = vrot.lane.b32.xlu0 %v598, 64
    %v847 = vpop.permute.xlu0 %846
    %848 = vrot.lane.b32.xlu0 %v599, 64
    %v849 = vpop.permute.xlu0 %848
    %850 = vrot.lane.b32.xlu0 %v600, 64
    %v851 = vpop.permute.xlu0 %850
    %852 = vrot.lane.b32.xlu0 %v601, 64
    %v853 = vpop.permute.xlu0 %852
    %854 = vrot.lane.b32.xlu0 %v602, 64
    %v855 = vpop.permute.xlu0 %854
    %856 = vrot.lane.b32.xlu0 %v603, 64
    %v857 = vpop.permute.xlu0 %856
    %858 = vrot.lane.b32.xlu0 %v604, 64
    %v859 = vpop.permute.xlu0 %858
    %868 = vmatprep.subr.bf16.mxu0 0
    %869 = vmatpush1.bf16.msra.mxu0 %v845
    %870 = vmatprep.subr.bf16.mxu0 0
    %871 = vmatpush1.bf16.msra.mxu0 %v847
    %872 = vmatprep.subr.bf16.mxu0 0
    %873 = vmatpush1.bf16.msra.mxu0 %v849
    %874 = vmatprep.subr.bf16.mxu0 0
    %875 = vmatpush1.bf16.msra.mxu0 %v851
    %876 = vmatprep.subr.bf16.mxu0 0
    %877 = vmatpush1.bf16.msra.mxu0 %v853
    %878 = vmatprep.subr.bf16.mxu0 0
    %879 = vmatpush1.bf16.msra.mxu0 %v855
    %880 = vmatprep.subr.bf16.mxu0 0
    %881 = vmatpush1.bf16.msra.mxu0 %v857
    %882 = vmatprep.subr.bf16.mxu0 0
    %883 = vmatpush1.bf16.msra.mxu0 %v859
    %884 = vmatprep.subr.bf16.mxu0 0
    %885 = vmatpush1.bf16.msra.mxu0 0
    %886 = vmatprep.subr.bf16.mxu0 0
    %887 = vmatpush1.bf16.msra.mxu0 0
    %888 = vmatprep.subr.bf16.mxu0 0
    %889 = vmatpush1.bf16.msra.mxu0 0
    %890 = vmatprep.subr.bf16.mxu0 0
    %891 = vmatpush1.bf16.msra.mxu0 0
    %892 = vmatprep.subr.bf16.mxu0 0
    %893 = vmatpush1.bf16.msra.mxu0 0
    %894 = vmatprep.subr.bf16.mxu0 0
    %895 = vmatpush1.bf16.msra.mxu0 0
    %896 = vmatprep.subr.bf16.mxu0 0
    %897 = vmatpush1.bf16.msra.mxu0 0
    %898 = vmatprep.subr.bf16.mxu0 0
    %899 = vmatpush1.bf16.msra.mxu0 0
    %900 = vmatprep.mubr.bf16.mxu0 0
    %901 = vmatmul.mubr.bf16.gmra.mrb[0].mxu0 %v834
    %v902 = vpop.f32.mrb[0].mxu0
    %v903 = vadd.f32 0.0, %v902
    %v904 = vpop.f32.mrb[0].mxu0
    %v905 = vpop.f32.mrb[0].mxu0
    %v906 = vadd.f32 0.0, %v905
    %v907 = vpop.f32.mrb[0].mxu0
    %908 = vmatprep.mubr.bf16.mxu0 0
    %909 = vmatmul.mubr.bf16.gmra.mrb[0].mxu0 %v835
    %v910 = vpop.f32.mrb[0].mxu0
    %v911 = vadd.f32 0.0, %v910
    %v912 = vpop.f32.mrb[0].mxu0
    %v913 = vpop.f32.mrb[0].mxu0
    %v914 = vadd.f32 0.0, %v913
    %v915 = vpop.f32.mrb[0].mxu0
    %916 = vdwg.mxu0
    %925 = vmatprep.subr.bf16.mxu0 0
    %926 = vmatpush1.bf16.msra.mxu0 %v533
    %927 = vmatprep.subr.bf16.mxu0 0
    %928 = vmatpush1.bf16.msra.mxu0 %v534
    %929 = vmatprep.subr.bf16.mxu0 0
    %930 = vmatpush1.bf16.msra.mxu0 %v535
    %931 = vmatprep.subr.bf16.mxu0 0
    %932 = vmatpush1.bf16.msra.mxu0 %v536
    %933 = vmatprep.subr.bf16.mxu0 0
    %934 = vmatpush1.bf16.msra.mxu0 %v537
    %935 = vmatprep.subr.bf16.mxu0 0
    %936 = vmatpush1.bf16.msra.mxu0 %v538
    %937 = vmatprep.subr.bf16.mxu0 0
    %938 = vmatpush1.bf16.msra.mxu0 %v539
    %939 = vmatprep.subr.bf16.mxu0 0
    %940 = vmatpush1.bf16.msra.mxu0 %v540
    %941 = vmatprep.subr.bf16.mxu0 0
    %942 = vmatpush1.bf16.msra.mxu0 0
    %943 = vmatprep.subr.bf16.mxu0 0
    %944 = vmatpush1.bf16.msra.mxu0 0
    %945 = vmatprep.subr.bf16.mxu0 0
    %946 = vmatpush1.bf16.msra.mxu0 0
    %947 = vmatprep.subr.bf16.mxu0 0
    %948 = vmatpush1.bf16.msra.mxu0 0
    %949 = vmatprep.subr.bf16.mxu0 0
    %950 = vmatpush1.bf16.msra.mxu0 0
    %951 = vmatprep.subr.bf16.mxu0 0
    %952 = vmatpush1.bf16.msra.mxu0 0
    %953 = vmatprep.subr.bf16.mxu0 0
    %954 = vmatpush1.bf16.msra.mxu0 0
    %955 = vmatprep.subr.bf16.mxu0 0
    %956 = vmatpush1.bf16.msra.mxu0 0
    %957 = vmatprep.mubr.bf16.mxu0 0
    %958 = vmatmul.mubr.bf16.gmra.mrb[0].mxu0 %v834
    %v959 = vpop.f32.mrb[0].mxu0
    %v960 = vadd.f32 0.0, %v959
    %v961 = vpop.f32.mrb[0].mxu0
    %v962 = vpop.f32.mrb[0].mxu0
    %v963 = vadd.f32 0.0, %v962
    %v964 = vpop.f32.mrb[0].mxu0
    %965 = vmatprep.mubr.bf16.mxu0 0
    %966 = vmatmul.mubr.bf16.gmra.mrb[0].mxu0 %v835
    %v967 = vpop.f32.mrb[0].mxu0
    %v968 = vadd.f32 0.0, %v967
    %v969 = vpop.f32.mrb[0].mxu0
    %v970 = vpop.f32.mrb[0].mxu0
    %v971 = vadd.f32 0.0, %v970
    %v972 = vpop.f32.mrb[0].mxu0
    %973 = vdwg.mxu0
    %v974 = vrcp.pop %v960
    %v975 = vrcp.pop %v963
    %v976 = vrcp.pop %v968
    %v977 = vrcp.pop %v971
    %v978 = vmul.f32 %v903, %v974
    %v979 = vmul.f32 %v906, %v975
    %v980 = vmul.f32 %v911, %v976
    %v981 = vmul.f32 %v914, %v977
    %v982 = vpack.c.bf16 %v979, %v978
    %v983 = vpack.c.bf16 %v981, %v980
    %v984 = vld [vmem:[%s11] sm:$0xf]
    %v985 = vld [vmem:[%s11 + $0x4] sm:$0xf]
    %v986 = vld [vmem:[%s11 + $0x8] sm:$0xf]
    %v987 = vld [vmem:[%s11 + $0xc] sm:$0xf]
    %v988 = vld [vmem:[%s12] sm:$0x1]
    %v990 = vlaneseq
    %v991 = vshrl.u32 %v990, 7
    %v992 = vsub.s32 0, %v991
    %v993 = vrot.slane %v988, %v992
    %v999 = vunpack.c.l.b16 %v984
    %v1000 = vunpack.c.l.b16 %v985
    %v1001 = vunpack.c.l.b16 %v986
    %v1002 = vunpack.c.l.b16 %v987
    %v1003 = vpack.c.b16 %v1000, %v999
    %v1004 = vpack.c.b16 %v1002, %v1001
    %v1008 = vsel %vm333, %v982, 0
    %v1011 = vsel %vm333, %v983, 0
    %1013 = vmatprep.subr.bf16.mxu0 0
    %1014 = vmatpush1.bf16.msra.mxu0 %v1003
    %1015 = vmatprep.subr.bf16.mxu0 0
    %1016 = vmatpush1.bf16.msra.mxu0 %v1004
    %1017 = vmatprep.subr.bf16.mxu0 0
    %1018 = vmatpush1.bf16.msra.mxu0 0
    %1019 = vmatprep.subr.bf16.mxu0 0
    %1020 = vmatpush1.bf16.msra.mxu0 0
    %1021 = vmatprep.subr.bf16.mxu0 0
    %1022 = vmatpush1.bf16.msra.mxu0 0
    %1023 = vmatprep.subr.bf16.mxu0 0
    %1024 = vmatpush1.bf16.msra.mxu0 0
    %1025 = vmatprep.subr.bf16.mxu0 0
    %1026 = vmatpush1.bf16.msra.mxu0 0
    %1027 = vmatprep.subr.bf16.mxu0 0
    %1028 = vmatpush1.bf16.msra.mxu0 0
    %1029 = vmatprep.subr.bf16.mxu0 0
    %1030 = vmatpush1.bf16.msra.mxu0 0
    %1031 = vmatprep.subr.bf16.mxu0 0
    %1032 = vmatpush1.bf16.msra.mxu0 0
    %1033 = vmatprep.subr.bf16.mxu0 0
    %1034 = vmatpush1.bf16.msra.mxu0 0
    %1035 = vmatprep.subr.bf16.mxu0 0
    %1036 = vmatpush1.bf16.msra.mxu0 0
    %1037 = vmatprep.subr.bf16.mxu0 0
    %1038 = vmatpush1.bf16.msra.mxu0 0
    %1039 = vmatprep.subr.bf16.mxu0 0
    %1040 = vmatpush1.bf16.msra.mxu0 0
    %1041 = vmatprep.subr.bf16.mxu0 0
    %1042 = vmatpush1.bf16.msra.mxu0 0
    %1043 = vmatprep.subr.bf16.mxu0 0
    %1044 = vmatpush1.bf16.msra.mxu0 0
    %1045 = vmatprep.mubr.bf16.mxu0 0
    %1046 = vmatmul.mubr.bf16.gmra.mrb[0].mxu0 %v1008
    %v1047 = vpop.f32.mrb[0].mxu0
    %v1048 = vadd.f32 %v993, %v1047
    %v1049 = vpop.f32.mrb[0].mxu0
    %v1050 = vpop.f32.mrb[0].mxu0
    %v1051 = vadd.f32 %v993, %v1050
    %v1052 = vpop.f32.mrb[0].mxu0
    %1053 = vmatprep.mubr.bf16.mxu0 0
    %1054 = vmatmul.mubr.bf16.gmra.mrb[0].mxu0 %v1011
    %v1055 = vpop.f32.mrb[0].mxu0
    %v1056 = vadd.f32 %v993, %v1055
    %v1057 = vpop.f32.mrb[0].mxu0
    %v1058 = vpop.f32.mrb[0].mxu0
    %v1059 = vadd.f32 %v993, %v1058
    %v1060 = vpop.f32.mrb[0].mxu0
    %1061 = vdwg.mxu0
    %v1062 = vadd.f32 %v415, %v1048
    %v1063 = vadd.f32 %v416, %v1051
    %v1064 = vadd.f32 %v417, %v1056
    %v1065 = vadd.f32 %v418, %v1059
    %v1066 = vld [vmem:[%s13] sm:$0x1]
    %v1067 = vld [vmem:[%s14] sm:$0x1]
    %v1068 = vsel %vm333, %v1062, 0.0
    %1069 = vadd.xlane.f32.xlu0 %v1068
    %v1070 = vpop.xlane.xlu0 %1069
    %v1071 = vsel %vm333, %v1063, 0.0
    %1072 = vadd.xlane.f32.xlu0 %v1071
    %v1073 = vpop.xlane.xlu0 %1072
    %v1074 = vsel %vm333, %v1064, 0.0
    %1075 = vadd.xlane.f32.xlu0 %v1074
    %v1076 = vpop.xlane.xlu0 %1075
    %v1077 = vsel %vm333, %v1065, 0.0
    %1078 = vadd.xlane.f32.xlu0 %v1077
    %v1079 = vpop.xlane.xlu0 %1078
    %v1080 = vmul.f32 %v1070, %v346
    %v1081 = vmul.f32 %v1073, %v346
    %v1082 = vmul.f32 %v1076, %v346
    %v1083 = vmul.f32 %v1079, %v346
    %v1084 = vmul.f32 %v1062, %v1062
    %v1085 = vmul.f32 %v1063, %v1063
    %v1086 = vmul.f32 %v1064, %v1064
    %v1087 = vmul.f32 %v1065, %v1065
    %v1088 = vsel %vm333, %v1084, 0.0
    %1089 = vadd.xlane.f32.xlu0 %v1088
    %v1090 = vpop.xlane.xlu0 %1089
    %v1091 = vsel %vm333, %v1085, 0.0
    %1092 = vadd.xlane.f32.xlu0 %v1091
    %v1093 = vpop.xlane.xlu0 %1092
    %v1094 = vsel %vm333, %v1086, 0.0
    %1095 = vadd.xlane.f32.xlu0 %v1094
    %v1096 = vpop.xlane.xlu0 %1095
    %v1097 = vsel %vm333, %v1087, 0.0
    %1098 = vadd.xlane.f32.xlu0 %v1097
    %v1099 = vpop.xlane.xlu0 %1098
    %v1100 = vmul.f32 %v1090, %v346
    %v1101 = vmul.f32 %v1093, %v346
    %v1102 = vmul.f32 %v1096, %v346
    %v1103 = vmul.f32 %v1099, %v346
    %v1104 = vmul.f32 %v1080, %v1080
    %v1105 = vmul.f32 %v1081, %v1081
    %v1106 = vmul.f32 %v1082, %v1082
    %v1107 = vmul.f32 %v1083, %v1083
    %v1108 = vsub.f32 %v1100, %v1104
    %v1109 = vsub.f32 %v1101, %v1105
    %v1110 = vsub.f32 %v1102, %v1106
    %v1111 = vsub.f32 %v1103, %v1107
    %v1112 = vmax.f32 %v1108, 0.0
    %v1113 = vmax.f32 %v1109, 0.0
    %v1114 = vmax.f32 %v1110, 0.0
    %v1115 = vmax.f32 %v1111, 0.0
    %v1116 = vsub.f32 %v1062, %v1080
    %v1117 = vsub.f32 %v1063, %v1081
    %v1118 = vsub.f32 %v1064, %v1082
    %v1119 = vsub.f32 %v1065, %v1083
    %v1120 = vadd.f32 %v1112, 1e-05
    %v1121 = vadd.f32 %v1113, 1e-05
    %v1122 = vadd.f32 %v1114, 1e-05
    %v1123 = vadd.f32 %v1115, 1e-05
    %v1124 = vrsqrt.pop %v1120
    %v1125 = vrsqrt.pop %v1121
    %v1126 = vrsqrt.pop %v1122
    %v1127 = vrsqrt.pop %v1123
    %v1128 = vmul.f32 %v1116, %v1124
    %v1129 = vmul.f32 %v1117, %v1125
    %v1130 = vmul.f32 %v1118, %v1126
    %v1131 = vmul.f32 %v1119, %v1127
    %v1133 = vlaneseq
    %v1134 = vshrl.u32 %v1133, 7
    %v1135 = vsub.s32 0, %v1134
    %v1136 = vrot.slane %v1066, %v1135
    %v1138 = vmul.f32 %v1128, %v1136
    %v1139 = vmul.f32 %v1129, %v1136
    %v1140 = vmul.f32 %v1130, %v1136
    %v1141 = vmul.f32 %v1131, %v1136
    %v1143 = vlaneseq
    %v1144 = vshrl.u32 %v1143, 7
    %v1145 = vsub.s32 0, %v1144
    %v1146 = vrot.slane %v1067, %v1145
    %v1148 = vadd.f32 %v1138, %v1146
    %v1149 = vadd.f32 %v1139, %v1146
    %v1150 = vadd.f32 %v1140, %v1146
    %v1151 = vadd.f32 %v1141, %v1146
    %v1152 = vpack.c.bf16 %v1149, %v1148
    %v1153 = vpack.c.bf16 %v1151, %v1150
    %v1154 = vld [vmem:[%s15] sm:$0xf]
    %v1155 = vld [vmem:[%s15 + $0x4] sm:$0xf]
    %v1156 = vld [vmem:[%s15 + $0x8] sm:$0xf]
    %v1157 = vld [vmem:[%s15 + $0xc] sm:$0xf]
    %v1158 = vld [vmem:[%s16] sm:$0x1]
    %v1160 = vlaneseq
    %v1161 = vshrl.u32 %v1160, 7
    %v1162 = vsub.s32 0, %v1161
    %v1163 = vrot.slane %v1158, %v1162
    %v1169 = vunpack.c.l.b16 %v1154
    %v1170 = vunpack.c.l.b16 %v1155
    %v1171 = vunpack.c.l.b16 %v1156
    %v1172 = vunpack.c.l.b16 %v1157
    %v1173 = vpack.c.b16 %v1170, %v1169
    %v1174 = vpack.c.b16 %v1172, %v1171
    %v1178 = vsel %vm333, %v1152, 0
    %v1181 = vsel %vm333, %v1153, 0
    %1183 = vmatprep.subr.bf16.mxu0 0
    %1184 = vmatpush1.bf16.msra.mxu0 %v1173
    %1185 = vmatprep.subr.bf16.mxu0 0
    %1186 = vmatpush1.bf16.msra.mxu0 %v1174
    %1187 = vmatprep.subr.bf16.mxu0 0
    %1188 = vmatpush1.bf16.msra.mxu0 0
    %1189 = vmatprep.subr.bf16.mxu0 0
    %1190 = vmatpush1.bf16.msra.mxu0 0
    %1191 = vmatprep.subr.bf16.mxu0 0
    %1192 = vmatpush1.bf16.msra.mxu0 0
    %1193 = vmatprep.subr.bf16.mxu0 0
    %1194 = vmatpush1.bf16.msra.mxu0 0
    %1195 = vmatprep.subr.bf16.mxu0 0
    %1196 = vmatpush1.bf16.msra.mxu0 0
    %1197 = vmatprep.subr.bf16.mxu0 0
    %1198 = vmatpush1.bf16.msra.mxu0 0
    %1199 = vmatprep.subr.bf16.mxu0 0
    %1200 = vmatpush1.bf16.msra.mxu0 0
    %1201 = vmatprep.subr.bf16.mxu0 0
    %1202 = vmatpush1.bf16.msra.mxu0 0
    %1203 = vmatprep.subr.bf16.mxu0 0
    %1204 = vmatpush1.bf16.msra.mxu0 0
    %1205 = vmatprep.subr.bf16.mxu0 0
    %1206 = vmatpush1.bf16.msra.mxu0 0
    %1207 = vmatprep.subr.bf16.mxu0 0
    %1208 = vmatpush1.bf16.msra.mxu0 0
    %1209 = vmatprep.subr.bf16.mxu0 0
    %1210 = vmatpush1.bf16.msra.mxu0 0
    %1211 = vmatprep.subr.bf16.mxu0 0
    %1212 = vmatpush1.bf16.msra.mxu0 0
    %1213 = vmatprep.subr.bf16.mxu0 0
    %1214 = vmatpush1.bf16.msra.mxu0 0
    %1215 = vmatprep.mubr.bf16.mxu0 0
    %1216 = vmatmul.mubr.bf16.gmra.mrb[0].mxu0 %v1178
    %v1217 = vpop.f32.mrb[0].mxu0
    %v1218 = vadd.f32 %v1163, %v1217
    %v1219 = vpop.f32.mrb[0].mxu0
    %v1220 = vpop.f32.mrb[0].mxu0
    %v1221 = vadd.f32 %v1163, %v1220
    %v1222 = vpop.f32.mrb[0].mxu0
    %1223 = vmatprep.mubr.bf16.mxu0 0
    %1224 = vmatmul.mubr.bf16.gmra.mrb[0].mxu0 %v1181
    %v1225 = vpop.f32.mrb[0].mxu0
    %v1226 = vadd.f32 %v1163, %v1225
    %v1227 = vpop.f32.mrb[0].mxu0
    %v1228 = vpop.f32.mrb[0].mxu0
    %v1229 = vadd.f32 %v1163, %v1228
    %v1230 = vpop.f32.mrb[0].mxu0
    %1231 = vdwg.mxu0
    %v1232 = vmax.f32 %v1218, 0.0
    %v1233 = vmax.f32 %v1221, 0.0
    %v1234 = vmax.f32 %v1226, 0.0
    %v1235 = vmax.f32 %v1229, 0.0
    %v1236 = vpack.c.bf16 %v1233, %v1232
    %v1237 = vpack.c.bf16 %v1235, %v1234
    %v1238 = vld [vmem:[%s17] sm:$0xf]
    %v1239 = vld [vmem:[%s17 + $0x4] sm:$0xf]
    %v1240 = vld [vmem:[%s17 + $0x8] sm:$0xf]
    %v1241 = vld [vmem:[%s17 + $0xc] sm:$0xf]
    %v1242 = vld [vmem:[%s17 + $0x10] sm:$0xf]
    %v1243 = vld [vmem:[%s17 + $0x14] sm:$0xf]
    %v1244 = vld [vmem:[%s17 + $0x18] sm:$0xf]
    %v1245 = vld [vmem:[%s17 + $0x1c] sm:$0xf]
    %v1246 = vld [vmem:[%s18] sm:$0x1]
    %v1248 = vlaneseq
    %v1249 = vshrl.u32 %v1248, 7
    %v1250 = vsub.s32 0, %v1249
    %v1251 = vrot.slane %v1246, %v1250
    %v1261 = vunpack.c.l.b16 %v1238
    %v1262 = vunpack.c.l.b16 %v1239
    %v1263 = vunpack.c.l.b16 %v1240
    %v1264 = vunpack.c.l.b16 %v1241
    %v1265 = vunpack.c.l.b16 %v1242
    %v1266 = vunpack.c.l.b16 %v1243
    %v1267 = vunpack.c.l.b16 %v1244
    %v1268 = vunpack.c.l.b16 %v1245
    %v1269 = vpack.c.b16 %v1262, %v1261
    %v1270 = vpack.c.b16 %v1264, %v1263
    %v1271 = vpack.c.b16 %v1266, %v1265
    %v1272 = vpack.c.b16 %v1268, %v1267
    %vm1277 = vcmask 523264
    %v1279 = vsel %vm1277, %v1236, 0
    %v1282 = vsel %vm1277, %v1237, 0
    %1284 = vmatprep.subr.bf16.mxu0 0
    %1285 = vmatpush1.bf16.msra.mxu0 %v1269
    %1286 = vmatprep.subr.bf16.mxu0 0
    %1287 = vmatpush1.bf16.msra.mxu0 %v1270
    %1288 = vmatprep.subr.bf16.mxu0 0
    %1289 = vmatpush1.bf16.msra.mxu0 %v1271
    %1290 = vmatprep.subr.bf16.mxu0 0
    %1291 = vmatpush1.bf16.msra.mxu0 %v1272
    %1292 = vmatprep.subr.bf16.mxu0 0
    %1293 = vmatpush1.bf16.msra.mxu0 0
    %1294 = vmatprep.subr.bf16.mxu0 0
    %1295 = vmatpush1.bf16.msra.mxu0 0
    %1296 = vmatprep.subr.bf16.mxu0 0
    %1297 = vmatpush1.bf16.msra.mxu0 0
    %1298 = vmatprep.subr.bf16.mxu0 0
    %1299 = vmatpush1.bf16.msra.mxu0 0
    %1300 = vmatprep.subr.bf16.mxu0 0
    %1301 = vmatpush1.bf16.msra.mxu0 0
    %1302 = vmatprep.subr.bf16.mxu0 0
    %1303 = vmatpush1.bf16.msra.mxu0 0
    %1304 = vmatprep.subr.bf16.mxu0 0
    %1305 = vmatpush1.bf16.msra.mxu0 0
    %1306 = vmatprep.subr.bf16.mxu0 0
    %1307 = vmatpush1.bf16.msra.mxu0 0
    %1308 = vmatprep.subr.bf16.mxu0 0
    %1309 = vmatpush1.bf16.msra.mxu0 0
    %1310 = vmatprep.subr.bf16.mxu0 0
    %1311 = vmatpush1.bf16.msra.mxu0 0
    %1312 = vmatprep.subr.bf16.mxu0 0
    %1313 = vmatpush1.bf16.msra.mxu0 0
    %1314 = vmatprep.subr.bf16.mxu0 0
    %1315 = vmatpush1.bf16.msra.mxu0 0
    %1316 = vmatprep.mubr.bf16.mxu0 0
    %1317 = vmatmul.mubr.bf16.gmra.mrb[0].mxu0 %v1279
    %v1318 = vpop.f32.mrb[0].mxu0
    %v1319 = vadd.f32 %v1251, %v1318
    %v1320 = vpop.f32.mrb[0].mxu0
    %v1321 = vpop.f32.mrb[0].mxu0
    %v1322 = vadd.f32 %v1251, %v1321
    %v1323 = vpop.f32.mrb[0].mxu0
    %1324 = vmatprep.mubr.bf16.mxu0 0
    %1325 = vmatmul.mubr.bf16.gmra.mrb[0].mxu0 %v1282
    %v1326 = vpop.f32.mrb[0].mxu0
    %v1327 = vadd.f32 %v1251, %v1326
    %v1328 = vpop.f32.mrb[0].mxu0
    %v1329 = vpop.f32.mrb[0].mxu0
    %v1330 = vadd.f32 %v1251, %v1329
    %v1331 = vpop.f32.mrb[0].mxu0
    %1332 = vdwg.mxu0
    %v1333 = vadd.f32 %v1148, %v1319
    %v1334 = vadd.f32 %v1149, %v1322
    %v1335 = vadd.f32 %v1150, %v1327
    %v1336 = vadd.f32 %v1151, %v1330
    %v1337 = vld [vmem:[%s19] sm:$0x1]
    %v1338 = vld [vmem:[%s20] sm:$0x1]
    %v1339 = vsel %vm333, %v1333, 0.0
    %1340 = vadd.xlane.f32.xlu0 %v1339
    %v1341 = vpop.xlane.xlu0 %1340
    %v1342 = vsel %vm333, %v1334, 0.0
    %1343 = vadd.xlane.f32.xlu0 %v1342
    %v1344 = vpop.xlane.xlu0 %1343
    %v1345 = vsel %vm333, %v1335, 0.0
    %1346 = vadd.xlane.f32.xlu0 %v1345
    %v1347 = vpop.xlane.xlu0 %1346
    %v1348 = vsel %vm333, %v1336, 0.0
    %1349 = vadd.xlane.f32.xlu0 %v1348
    %v1350 = vpop.xlane.xlu0 %1349
    %v1351 = vmul.f32 %v1341, %v346
    %v1352 = vmul.f32 %v1344, %v346
    %v1353 = vmul.f32 %v1347, %v346
    %v1354 = vmul.f32 %v1350, %v346
    %v1355 = vmul.f32 %v1333, %v1333
    %v1356 = vmul.f32 %v1334, %v1334
    %v1357 = vmul.f32 %v1335, %v1335
    %v1358 = vmul.f32 %v1336, %v1336
    %v1359 = vsel %vm333, %v1355, 0.0
    %1360 = vadd.xlane.f32.xlu0 %v1359
    %v1361 = vpop.xlane.xlu0 %1360
    %v1362 = vsel %vm333, %v1356, 0.0
    %1363 = vadd.xlane.f32.xlu0 %v1362
    %v1364 = vpop.xlane.xlu0 %1363
    %v1365 = vsel %vm333, %v1357, 0.0
    %1366 = vadd.xlane.f32.xlu0 %v1365
    %v1367 = vpop.xlane.xlu0 %1366
    %v1368 = vsel %vm333, %v1358, 0.0
    %1369 = vadd.xlane.f32.xlu0 %v1368
    %v1370 = vpop.xlane.xlu0 %1369
    %v1371 = vmul.f32 %v1361, %v346
    %v1372 = vmul.f32 %v1364, %v346
    %v1373 = vmul.f32 %v1367, %v346
    %v1374 = vmul.f32 %v1370, %v346
    %v1375 = vmul.f32 %v1351, %v1351
    %v1376 = vmul.f32 %v1352, %v1352
    %v1377 = vmul.f32 %v1353, %v1353
    %v1378 = vmul.f32 %v1354, %v1354
    %v1379 = vsub.f32 %v1371, %v1375
    %v1380 = vsub.f32 %v1372, %v1376
    %v1381 = vsub.f32 %v1373, %v1377
    %v1382 = vsub.f32 %v1374, %v1378
    %v1383 = vmax.f32 %v1379, 0.0
    %v1384 = vmax.f32 %v1380, 0.0
    %v1385 = vmax.f32 %v1381, 0.0
    %v1386 = vmax.f32 %v1382, 0.0
    %v1387 = vsub.f32 %v1333, %v1351
    %v1388 = vsub.f32 %v1334, %v1352
    %v1389 = vsub.f32 %v1335, %v1353
    %v1390 = vsub.f32 %v1336, %v1354
    %v1391 = vadd.f32 %v1383, 1e-05
    %v1392 = vadd.f32 %v1384, 1e-05
    %v1393 = vadd.f32 %v1385, 1e-05
    %v1394 = vadd.f32 %v1386, 1e-05
    %v1395 = vrsqrt.pop %v1391
    %v1396 = vrsqrt.pop %v1392
    %v1397 = vrsqrt.pop %v1393
    %v1398 = vrsqrt.pop %v1394
    %v1399 = vmul.f32 %v1387, %v1395
    %v1400 = vmul.f32 %v1388, %v1396
    %v1401 = vmul.f32 %v1389, %v1397
    %v1402 = vmul.f32 %v1390, %v1398
    %v1404 = vlaneseq
    %v1405 = vshrl.u32 %v1404, 7
    %v1406 = vsub.s32 0, %v1405
    %v1407 = vrot.slane %v1337, %v1406
    %v1409 = vmul.f32 %v1399, %v1407
    %v1410 = vmul.f32 %v1400, %v1407
    %v1411 = vmul.f32 %v1401, %v1407
    %v1412 = vmul.f32 %v1402, %v1407
    %v1414 = vlaneseq
    %v1415 = vshrl.u32 %v1414, 7
    %v1416 = vsub.s32 0, %v1415
    %v1417 = vrot.slane %v1338, %v1416
    %v1419 = vadd.f32 %v1409, %v1417
    %v1420 = vadd.f32 %v1410, %v1417
    %v1421 = vadd.f32 %v1411, %v1417
    %v1422 = vadd.f32 %v1412, %v1417
    %v1423 = vpack.c.bf16 %v1420, %v1419
    %v1424 = vpack.c.bf16 %v1422, %v1421
    %s1425 = scalar_lea.vmem %s9, 16
    %v1426 = vld [vmem:[%s1425] sm:$0xf]
    %v1427 = vld [vmem:[%s1425 + $0x4] sm:$0xf]
    %v1428 = vld [vmem:[%s1425 + $0x8] sm:$0xf]
    %v1429 = vld [vmem:[%s1425 + $0xc] sm:$0xf]
    %s1430 = scalar_lea.vmem %s10, 1
    %v1431 = vld [vmem:[%s1430] sm:$0x1]
    %v1433 = vlaneseq
    %v1434 = vshrl.u32 %v1433, 7
    %v1435 = vsub.s32 0, %v1434
    %v1436 = vrot.slane %v1431, %v1435
    %v1442 = vunpack.c.l.b16 %v1426
    %v1443 = vunpack.c.l.b16 %v1427
    %v1444 = vunpack.c.l.b16 %v1428
    %v1445 = vunpack.c.l.b16 %v1429
    %v1446 = vpack.c.b16 %v1443, %v1442
    %v1447 = vpack.c.b16 %v1445, %v1444
    %v1451 = vsel %vm333, %v1423, 0
    %v1454 = vsel %vm333, %v1424, 0
    %1456 = vmatprep.subr.bf16.mxu0 0
    %1457 = vmatpush1.bf16.msra.mxu0 %v1446
    %1458 = vmatprep.subr.bf16.mxu0 0
    %1459 = vmatpush1.bf16.msra.mxu0 %v1447
    %1460 = vmatprep.subr.bf16.mxu0 0
    %1461 = vmatpush1.bf16.msra.mxu0 0
    %1462 = vmatprep.subr.bf16.mxu0 0
    %1463 = vmatpush1.bf16.msra.mxu0 0
    %1464 = vmatprep.subr.bf16.mxu0 0
    %1465 = vmatpush1.bf16.msra.mxu0 0
    %1466 = vmatprep.subr.bf16.mxu0 0
    %1467 = vmatpush1.bf16.msra.mxu0 0
    %1468 = vmatprep.subr.bf16.mxu0 0
    %1469 = vmatpush1.bf16.msra.mxu0 0
    %1470 = vmatprep.subr.bf16.mxu0 0
    %1471 = vmatpush1.bf16.msra.mxu0 0
    %1472 = vmatprep.subr.bf16.mxu0 0
    %1473 = vmatpush1.bf16.msra.mxu0 0
    %1474 = vmatprep.subr.bf16.mxu0 0
    %1475 = vmatpush1.bf16.msra.mxu0 0
    %1476 = vmatprep.subr.bf16.mxu0 0
    %1477 = vmatpush1.bf16.msra.mxu0 0
    %1478 = vmatprep.subr.bf16.mxu0 0
    %1479 = vmatpush1.bf16.msra.mxu0 0
    %1480 = vmatprep.subr.bf16.mxu0 0
    %1481 = vmatpush1.bf16.msra.mxu0 0
    %1482 = vmatprep.subr.bf16.mxu0 0
    %1483 = vmatpush1.bf16.msra.mxu0 0
    %1484 = vmatprep.subr.bf16.mxu0 0
    %1485 = vmatpush1.bf16.msra.mxu0 0
    %1486 = vmatprep.subr.bf16.mxu0 0
    %1487 = vmatpush1.bf16.msra.mxu0 0
    %1488 = vmatprep.mubr.bf16.mxu0 0
    %1489 = vmatmul.mubr.bf16.gmra.mrb[0].mxu0 %v1451
    %v1490 = vpop.f32.mrb[0].mxu0
    %v1491 = vadd.f32 %v1436, %v1490
    %v1492 = vpop.f32.mrb[0].mxu0
    %v1493 = vpop.f32.mrb[0].mxu0
    %v1494 = vadd.f32 %v1436, %v1493
    %v1495 = vpop.f32.mrb[0].mxu0
    %1496 = vmatprep.mubr.bf16.mxu0 0
    %1497 = vmatmul.mubr.bf16.gmra.mrb[0].mxu0 %v1454
    %v1498 = vpop.f32.mrb[0].mxu0
    %v1499 = vadd.f32 %v1436, %v1498
    %v1500 = vpop.f32.mrb[0].mxu0
    %v1501 = vpop.f32.mrb[0].mxu0
    %v1502 = vadd.f32 %v1436, %v1501
    %v1503 = vpop.f32.mrb[0].mxu0
    %1504 = vdwg.mxu0
    %v1505 = vpack.c.bf16 %v1494, %v1491
    %v1506 = vpack.c.bf16 %v1502, %v1499
    %v1507 = vmul.bf16 %v1505, %v542
    %v1508 = vmul.bf16 %v1506, %v544
    %v1509 = vmul.bf16 %v1505, %v546
    %v1510 = vmul.bf16 %v1506, %v548
    %v1511 = vmul.bf16 %v1505, %v550
    %v1512 = vmul.bf16 %v1506, %v552
    %v1513 = vmul.bf16 %v1505, %v554
    %v1514 = vmul.bf16 %v1506, %v556
    %v1515 = vmul.bf16 %v1505, %v574
    %v1516 = vmul.bf16 %v1506, %v576
    %v1517 = vmul.bf16 %v1505, %v578
    %v1518 = vmul.bf16 %v1506, %v580
    %v1519 = vmul.bf16 %v1505, %v582
    %v1520 = vmul.bf16 %v1506, %v584
    %v1521 = vmul.bf16 %v1505, %v586
    %v1522 = vmul.bf16 %v1506, %v588
    %1531 = vrot.lane.b32.xlu0 %v1507, 96
    %v1532 = vpop.permute.xlu0 %1531
    %1533 = vrot.lane.b32.xlu0 %v1508, 96
    %v1534 = vpop.permute.xlu0 %1533
    %1535 = vrot.lane.b32.xlu0 %v1509, 96
    %v1536 = vpop.permute.xlu0 %1535
    %1537 = vrot.lane.b32.xlu0 %v1510, 96
    %v1538 = vpop.permute.xlu0 %1537
    %1539 = vrot.lane.b32.xlu0 %v1511, 96
    %v1540 = vpop.permute.xlu0 %1539
    %1541 = vrot.lane.b32.xlu0 %v1512, 96
    %v1542 = vpop.permute.xlu0 %1541
    %1543 = vrot.lane.b32.xlu0 %v1513, 96
    %v1544 = vpop.permute.xlu0 %1543
    %1545 = vrot.lane.b32.xlu0 %v1514, 96
    %v1546 = vpop.permute.xlu0 %1545
    %v1548 = vsel %vm333, %v1505, 0
    %v1551 = vsel %vm333, %v1506, 0
    %v1554 = vsel %vm333, %v1532, 0
    %v1557 = vsel %vm333, %v1534, 0
    %v1560 = vsel %vm333, %v1536, 0
    %v1563 = vsel %vm333, %v1538, 0
    %v1566 = vsel %vm333, %v1540, 0
    %v1569 = vsel %vm333, %v1542, 0
    %v1572 = vsel %vm333, %v1544, 0
    %v1575 = vsel %vm333, %v1546, 0
    %1577 = vmatprep.subr.bf16.mxu0 0
    %1578 = vmatpush1.bf16.xpose.msra.mxu0 %v1554
    %1579 = vmatprep.subr.bf16.mxu0 0
    %1580 = vmatpush1.bf16.xpose.msra.mxu0 %v1557
    %1581 = vmatprep.subr.bf16.mxu0 0
    %1582 = vmatpush1.bf16.xpose.msra.mxu0 %v1560
    %1583 = vmatprep.subr.bf16.mxu0 0
    %1584 = vmatpush1.bf16.xpose.msra.mxu0 %v1563
    %1585 = vmatprep.subr.bf16.mxu0 0
    %1586 = vmatpush1.bf16.xpose.msra.mxu0 %v1566
    %1587 = vmatprep.subr.bf16.mxu0 0
    %1588 = vmatpush1.bf16.xpose.msra.mxu0 %v1569
    %1589 = vmatprep.subr.bf16.mxu0 0
    %1590 = vmatpush1.bf16.xpose.msra.mxu0 %v1572
    %1591 = vmatprep.subr.bf16.mxu0 0
    %1592 = vmatpush1.bf16.xpose.msra.mxu0 %v1575
    %1593 = vmatprep.subr.bf16.mxu0 0
    %1594 = vmatpush1.bf16.xpose.msra.mxu0 0
    %1595 = vmatprep.subr.bf16.mxu0 0
    %1596 = vmatpush1.bf16.xpose.msra.mxu0 0
    %1597 = vmatprep.subr.bf16.mxu0 0
    %1598 = vmatpush1.bf16.xpose.msra.mxu0 0
    %1599 = vmatprep.subr.bf16.mxu0 0
    %1600 = vmatpush1.bf16.xpose.msra.mxu0 0
    %1601 = vmatprep.subr.bf16.mxu0 0
    %1602 = vmatpush1.bf16.xpose.msra.mxu0 0
    %1603 = vmatprep.subr.bf16.mxu0 0
    %1604 = vmatpush1.bf16.xpose.msra.mxu0 0
    %1605 = vmatprep.subr.bf16.mxu0 0
    %1606 = vmatpush1.bf16.xpose.msra.mxu0 0
    %1607 = vmatprep.subr.bf16.mxu0 0
    %1608 = vmatpush1.bf16.xpose.msra.mxu0 0
    %1609 = vmatprep.mubr.bf16.mxu0 0
    %1610 = vmatmul.mubr.bf16.gmra.mrb[0].mxu0 %v1548
    %v1611 = vpop.f32.mrb[0].mxu0
    %v1612 = vadd.f32 %v86, %v1611
    %v1613 = vpop.f32.mrb[0].mxu0
    %v1614 = vpop.f32.mrb[0].mxu0
    %v1615 = vadd.f32 %v87, %v1614
    %v1616 = vpop.f32.mrb[0].mxu0
    %1617 = vmatprep.mubr.bf16.mxu0 0
    %1618 = vmatmul.mubr.bf16.gmra.mrb[0].mxu0 %v1551
    %v1619 = vpop.f32.mrb[0].mxu0
    %v1620 = vadd.f32 %v88, %v1619
    %v1621 = vpop.f32.mrb[0].mxu0
    %v1622 = vpop.f32.mrb[0].mxu0
    %v1623 = vadd.f32 %v89, %v1622
    %v1624 = vpop.f32.mrb[0].mxu0
    %1625 = vdwg.mxu0
    %v1626 = vsel %vm714, %v1612, -1e+30
    %v1627 = vsel %vm714, %v1615, -1e+30
    %v1628 = vsel %vm714, %v1620, -1e+30
    %v1629 = vsel %vm714, %v1623, -1e+30
    %1630 = vmax.xlane.f32.xlu0 %v1626
    %v1631 = vpop.xlane.xlu0 %1630
    %1632 = vmax.xlane.f32.xlu0 %v1627
    %v1633 = vpop.xlane.xlu0 %1632
    %1634 = vmax.xlane.f32.xlu0 %v1628
    %v1635 = vpop.xlane.xlu0 %1634
    %1636 = vmax.xlane.f32.xlu0 %v1629
    %v1637 = vpop.xlane.xlu0 %1636
    %v1638 = vmul.f32 %v1631, %v730
    %v1639 = vmul.f32 %v1633, %v730
    %v1640 = vmul.f32 %v1635, %v730
    %v1641 = vmul.f32 %v1637, %v730
    %v1642 = vsel %vm739, %v1612, -1e+30
    %v1643 = vsel %vm739, %v1615, -1e+30
    %v1644 = vsel %vm739, %v1620, -1e+30
    %v1645 = vsel %vm739, %v1623, -1e+30
    %1646 = vmax.xlane.f32.xlu0 %v1642
    %v1647 = vpop.xlane.xlu0 %1646
    %1648 = vmax.xlane.f32.xlu0 %v1643
    %v1649 = vpop.xlane.xlu0 %1648
    %1650 = vmax.xlane.f32.xlu0 %v1644
    %v1651 = vpop.xlane.xlu0 %1650
    %1652 = vmax.xlane.f32.xlu0 %v1645
    %v1653 = vpop.xlane.xlu0 %1652
    %v1654 = vmul.f32 %v1647, %v755
    %v1655 = vmul.f32 %v1649, %v755
    %v1656 = vmul.f32 %v1651, %v755
    %v1657 = vmul.f32 %v1653, %v755
    %v1658 = vadd.f32 %v1638, %v1654
    %v1659 = vadd.f32 %v1639, %v1655
    %v1660 = vadd.f32 %v1640, %v1656
    %v1661 = vadd.f32 %v1641, %v1657
    %v1662 = vsel %vm768, %v1612, -1e+30
    %v1663 = vsel %vm768, %v1615, -1e+30
    %v1664 = vsel %vm768, %v1620, -1e+30
    %v1665 = vsel %vm768, %v1623, -1e+30
    %1666 = vmax.xlane.f32.xlu0 %v1662
    %v1667 = vpop.xlane.xlu0 %1666
    %1668 = vmax.xlane.f32.xlu0 %v1663
    %v1669 = vpop.xlane.xlu0 %1668
    %1670 = vmax.xlane.f32.xlu0 %v1664
    %v1671 = vpop.xlane.xlu0 %1670
    %1672 = vmax.xlane.f32.xlu0 %v1665
    %v1673 = vpop.xlane.xlu0 %1672
    %v1674 = vmul.f32 %v1667, %v784
    %v1675 = vmul.f32 %v1669, %v784
    %v1676 = vmul.f32 %v1671, %v784
    %v1677 = vmul.f32 %v1673, %v784
    %v1678 = vadd.f32 %v1658, %v1674
    %v1679 = vadd.f32 %v1659, %v1675
    %v1680 = vadd.f32 %v1660, %v1676
    %v1681 = vadd.f32 %v1661, %v1677
    %v1682 = vsel %vm797, %v1612, -1e+30
    %v1683 = vsel %vm797, %v1615, -1e+30
    %v1684 = vsel %vm797, %v1620, -1e+30
    %v1685 = vsel %vm797, %v1623, -1e+30
    %1686 = vmax.xlane.f32.xlu0 %v1682
    %v1687 = vpop.xlane.xlu0 %1686
    %1688 = vmax.xlane.f32.xlu0 %v1683
    %v1689 = vpop.xlane.xlu0 %1688
    %1690 = vmax.xlane.f32.xlu0 %v1684
    %v1691 = vpop.xlane.xlu0 %1690
    %1692 = vmax.xlane.f32.xlu0 %v1685
    %v1693 = vpop.xlane.xlu0 %1692
    %v1694 = vmul.f32 %v1687, %v813
    %v1695 = vmul.f32 %v1689, %v813
    %v1696 = vmul.f32 %v1691, %v813
    %v1697 = vmul.f32 %v1693, %v813
    %v1698 = vadd.f32 %v1678, %v1694
    %v1699 = vadd.f32 %v1679, %v1695
    %v1700 = vadd.f32 %v1680, %v1696
    %v1701 = vadd.f32 %v1681, %v1697
    %v1702 = vsub.f32 %v1612, %v1698
    %v1703 = vsub.f32 %v1615, %v1699
    %v1704 = vsub.f32 %v1620, %v1700
    %v1705 = vsub.f32 %v1623, %v1701
    %v1706 = vmul.f32 %v1702, 1.442695
    %v1707 = vpow.pop %v1706
    %v1708 = vmul.f32 %v1703, 1.442695
    %v1709 = vpow.pop %v1708
    %v1710 = vmul.f32 %v1704, 1.442695
    %v1711 = vpow.pop %v1710
    %v1712 = vmul.f32 %v1705, 1.442695
    %v1713 = vpow.pop %v1712
    %v1714 = vpack.c.bf16 %v1709, %v1707
    %v1715 = vpack.c.bf16 %v1713, %v1711
    %1724 = vrot.lane.b32.xlu0 %v1515, 64
    %v1725 = vpop.permute.xlu0 %1724
    %1726 = vrot.lane.b32.xlu0 %v1516, 64
    %v1727 = vpop.permute.xlu0 %1726
    %1728 = vrot.lane.b32.xlu0 %v1517, 64
    %v1729 = vpop.permute.xlu0 %1728
    %1730 = vrot.lane.b32.xlu0 %v1518, 64
    %v1731 = vpop.permute.xlu0 %1730
    %1732 = vrot.lane.b32.xlu0 %v1519, 64
    %v1733 = vpop.permute.xlu0 %1732
    %1734 = vrot.lane.b32.xlu0 %v1520, 64
    %v1735 = vpop.permute.xlu0 %1734
    %1736 = vrot.lane.b32.xlu0 %v1521, 64
    %v1737 = vpop.permute.xlu0 %1736
    %1738 = vrot.lane.b32.xlu0 %v1522, 64
    %v1739 = vpop.permute.xlu0 %1738
    %1748 = vmatprep.subr.bf16.mxu0 0
    %1749 = vmatpush1.bf16.msra.mxu0 %v1725
    %1750 = vmatprep.subr.bf16.mxu0 0
    %1751 = vmatpush1.bf16.msra.mxu0 %v1727
    %1752 = vmatprep.subr.bf16.mxu0 0
    %1753 = vmatpush1.bf16.msra.mxu0 %v1729
    %1754 = vmatprep.subr.bf16.mxu0 0
    %1755 = vmatpush1.bf16.msra.mxu0 %v1731
    %1756 = vmatprep.subr.bf16.mxu0 0
    %1757 = vmatpush1.bf16.msra.mxu0 %v1733
    %1758 = vmatprep.subr.bf16.mxu0 0
    %1759 = vmatpush1.bf16.msra.mxu0 %v1735
    %1760 = vmatprep.subr.bf16.mxu0 0
    %1761 = vmatpush1.bf16.msra.mxu0 %v1737
    %1762 = vmatprep.subr.bf16.mxu0 0
    %1763 = vmatpush1.bf16.msra.mxu0 %v1739
    %1764 = vmatprep.subr.bf16.mxu0 0
    %1765 = vmatpush1.bf16.msra.mxu0 0
    %1766 = vmatprep.subr.bf16.mxu0 0
    %1767 = vmatpush1.bf16.msra.mxu0 0
    %1768 = vmatprep.subr.bf16.mxu0 0
    %1769 = vmatpush1.bf16.msra.mxu0 0
    %1770 = vmatprep.subr.bf16.mxu0 0
    %1771 = vmatpush1.bf16.msra.mxu0 0
    %1772 = vmatprep.subr.bf16.mxu0 0
    %1773 = vmatpush1.bf16.msra.mxu0 0
    %1774 = vmatprep.subr.bf16.mxu0 0
    %1775 = vmatpush1.bf16.msra.mxu0 0
    %1776 = vmatprep.subr.bf16.mxu0 0
    %1777 = vmatpush1.bf16.msra.mxu0 0
    %1778 = vmatprep.subr.bf16.mxu0 0
    %1779 = vmatpush1.bf16.msra.mxu0 0
    %1780 = vmatprep.mubr.bf16.mxu0 0
    %1781 = vmatmul.mubr.bf16.gmra.mrb[0].mxu0 %v1714
    %v1782 = vpop.f32.mrb[0].mxu0
    %v1783 = vadd.f32 0.0, %v1782
    %v1784 = vpop.f32.mrb[0].mxu0
    %v1785 = vpop.f32.mrb[0].mxu0
    %v1786 = vadd.f32 0.0, %v1785
    %v1787 = vpop.f32.mrb[0].mxu0
    %1788 = vmatprep.mubr.bf16.mxu0 0
    %1789 = vmatmul.mubr.bf16.gmra.mrb[0].mxu0 %v1715
    %v1790 = vpop.f32.mrb[0].mxu0
    %v1791 = vadd.f32 0.0, %v1790
    %v1792 = vpop.f32.mrb[0].mxu0
    %v1793 = vpop.f32.mrb[0].mxu0
    %v1794 = vadd.f32 0.0, %v1793
    %v1795 = vpop.f32.mrb[0].mxu0
    %1796 = vdwg.mxu0
    %1797 = vmatprep.subr.bf16.mxu0 0
    %1798 = vmatpush1.bf16.msra.mxu0 %v533
    %1799 = vmatprep.subr.bf16.mxu0 0
    %1800 = vmatpush1.bf16.msra.mxu0 %v534
    %1801 = vmatprep.subr.bf16.mxu0 0
    %1802 = vmatpush1.bf16.msra.mxu0 %v535
    %1803 = vmatprep.subr.bf16.mxu0 0
    %1804 = vmatpush1.bf16.msra.mxu0 %v536
    %1805 = vmatprep.subr.bf16.mxu0 0
    %1806 = vmatpush1.bf16.msra.mxu0 %v537
    %1807 = vmatprep.subr.bf16.mxu0 0
    %1808 = vmatpush1.bf16.msra.mxu0 %v538
    %1809 = vmatprep.subr.bf16.mxu0 0
    %1810 = vmatpush1.bf16.msra.mxu0 %v539
    %1811 = vmatprep.subr.bf16.mxu0 0
    %1812 = vmatpush1.bf16.msra.mxu0 %v540
    %1813 = vmatprep.subr.bf16.mxu0 0
    %1814 = vmatpush1.bf16.msra.mxu0 0
    %1815 = vmatprep.subr.bf16.mxu0 0
    %1816 = vmatpush1.bf16.msra.mxu0 0
    %1817 = vmatprep.subr.bf16.mxu0 0
    %1818 = vmatpush1.bf16.msra.mxu0 0
    %1819 = vmatprep.subr.bf16.mxu0 0
    %1820 = vmatpush1.bf16.msra.mxu0 0
    %1821 = vmatprep.subr.bf16.mxu0 0
    %1822 = vmatpush1.bf16.msra.mxu0 0
    %1823 = vmatprep.subr.bf16.mxu0 0
    %1824 = vmatpush1.bf16.msra.mxu0 0
    %1825 = vmatprep.subr.bf16.mxu0 0
    %1826 = vmatpush1.bf16.msra.mxu0 0
    %1827 = vmatprep.subr.bf16.mxu0 0
    %1828 = vmatpush1.bf16.msra.mxu0 0
    %1829 = vmatprep.mubr.bf16.mxu0 0
    %1830 = vmatmul.mubr.bf16.gmra.mrb[0].mxu0 %v1714
    %v1831 = vpop.f32.mrb[0].mxu0
    %v1832 = vadd.f32 0.0, %v1831
    %v1833 = vpop.f32.mrb[0].mxu0
    %v1834 = vpop.f32.mrb[0].mxu0
    %v1835 = vadd.f32 0.0, %v1834
    %v1836 = vpop.f32.mrb[0].mxu0
    %1837 = vmatprep.mubr.bf16.mxu0 0
    %1838 = vmatmul.mubr.bf16.gmra.mrb[0].mxu0 %v1715
    %v1839 = vpop.f32.mrb[0].mxu0
    %v1840 = vadd.f32 0.0, %v1839
    %v1841 = vpop.f32.mrb[0].mxu0
    %v1842 = vpop.f32.mrb[0].mxu0
    %v1843 = vadd.f32 0.0, %v1842
    %v1844 = vpop.f32.mrb[0].mxu0
    %1845 = vdwg.mxu0
    %v1846 = vrcp.pop %v1832
    %v1847 = vrcp.pop %v1835
    %v1848 = vrcp.pop %v1840
    %v1849 = vrcp.pop %v1843
    %v1850 = vmul.f32 %v1783, %v1846
    %v1851 = vmul.f32 %v1786, %v1847
    %v1852 = vmul.f32 %v1791, %v1848
    %v1853 = vmul.f32 %v1794, %v1849
    %v1854 = vpack.c.bf16 %v1851, %v1850
    %v1855 = vpack.c.bf16 %v1853, %v1852
    %s1856 = scalar_lea.vmem %s11, 16
    %v1857 = vld [vmem:[%s1856] sm:$0xf]
    %v1858 = vld [vmem:[%s1856 + $0x4] sm:$0xf]
    %v1859 = vld [vmem:[%s1856 + $0x8] sm:$0xf]
    %v1860 = vld [vmem:[%s1856 + $0xc] sm:$0xf]
    %s1861 = scalar_lea.vmem %s12, 1
    %v1862 = vld [vmem:[%s1861] sm:$0x1]
    %v1864 = vlaneseq
    %v1865 = vshrl.u32 %v1864, 7
    %v1866 = vsub.s32 0, %v1865
    %v1867 = vrot.slane %v1862, %v1866
    %v1873 = vunpack.c.l.b16 %v1857
    %v1874 = vunpack.c.l.b16 %v1858
    %v1875 = vunpack.c.l.b16 %v1859
    %v1876 = vunpack.c.l.b16 %v1860
    %v1877 = vpack.c.b16 %v1874, %v1873
    %v1878 = vpack.c.b16 %v1876, %v1875
    %v1882 = vsel %vm333, %v1854, 0
    %v1885 = vsel %vm333, %v1855, 0
    %1887 = vmatprep.subr.bf16.mxu0 0
    %1888 = vmatpush1.bf16.msra.mxu0 %v1877
    %1889 = vmatprep.subr.bf16.mxu0 0
    %1890 = vmatpush1.bf16.msra.mxu0 %v1878
    %1891 = vmatprep.subr.bf16.mxu0 0
    %1892 = vmatpush1.bf16.msra.mxu0 0
    %1893 = vmatprep.subr.bf16.mxu0 0
    %1894 = vmatpush1.bf16.msra.mxu0 0
    %1895 = vmatprep.subr.bf16.mxu0 0
    %1896 = vmatpush1.bf16.msra.mxu0 0
    %1897 = vmatprep.subr.bf16.mxu0 0
    %1898 = vmatpush1.bf16.msra.mxu0 0
    %1899 = vmatprep.subr.bf16.mxu0 0
    %1900 = vmatpush1.bf16.msra.mxu0 0
    %1901 = vmatprep.subr.bf16.mxu0 0
    %1902 = vmatpush1.bf16.msra.mxu0 0
    %1903 = vmatprep.subr.bf16.mxu0 0
    %1904 = vmatpush1.bf16.msra.mxu0 0
    %1905 = vmatprep.subr.bf16.mxu0 0
    %1906 = vmatpush1.bf16.msra.mxu0 0
    %1907 = vmatprep.subr.bf16.mxu0 0
    %1908 = vmatpush1.bf16.msra.mxu0 0
    %1909 = vmatprep.subr.bf16.mxu0 0
    %1910 = vmatpush1.bf16.msra.mxu0 0
    %1911 = vmatprep.subr.bf16.mxu0 0
    %1912 = vmatpush1.bf16.msra.mxu0 0
    %1913 = vmatprep.subr.bf16.mxu0 0
    %1914 = vmatpush1.bf16.msra.mxu0 0
    %1915 = vmatprep.subr.bf16.mxu0 0
    %1916 = vmatpush1.bf16.msra.mxu0 0
    %1917 = vmatprep.subr.bf16.mxu0 0
    %1918 = vmatpush1.bf16.msra.mxu0 0
    %1919 = vmatprep.mubr.bf16.mxu0 0
    %1920 = vmatmul.mubr.bf16.gmra.mrb[0].mxu0 %v1882
    %v1921 = vpop.f32.mrb[0].mxu0
    %v1922 = vadd.f32 %v1867, %v1921
    %v1923 = vpop.f32.mrb[0].mxu0
    %v1924 = vpop.f32.mrb[0].mxu0
    %v1925 = vadd.f32 %v1867, %v1924
    %v1926 = vpop.f32.mrb[0].mxu0
    %1927 = vmatprep.mubr.bf16.mxu0 0
    %1928 = vmatmul.mubr.bf16.gmra.mrb[0].mxu0 %v1885
    %v1929 = vpop.f32.mrb[0].mxu0
    %v1930 = vadd.f32 %v1867, %v1929
    %v1931 = vpop.f32.mrb[0].mxu0
    %v1932 = vpop.f32.mrb[0].mxu0
    %v1933 = vadd.f32 %v1867, %v1932
    %v1934 = vpop.f32.mrb[0].mxu0
    %1935 = vdwg.mxu0
    %v1936 = vadd.f32 %v1419, %v1922
    %v1937 = vadd.f32 %v1420, %v1925
    %v1938 = vadd.f32 %v1421, %v1930
    %v1939 = vadd.f32 %v1422, %v1933
    %s1940 = scalar_lea.vmem %s13, 1
    %v1941 = vld [vmem:[%s1940] sm:$0x1]
    %s1942 = scalar_lea.vmem %s14, 1
    %v1943 = vld [vmem:[%s1942] sm:$0x1]
    %v1944 = vsel %vm333, %v1936, 0.0
    %1945 = vadd.xlane.f32.xlu0 %v1944
    %v1946 = vpop.xlane.xlu0 %1945
    %v1947 = vsel %vm333, %v1937, 0.0
    %1948 = vadd.xlane.f32.xlu0 %v1947
    %v1949 = vpop.xlane.xlu0 %1948
    %v1950 = vsel %vm333, %v1938, 0.0
    %1951 = vadd.xlane.f32.xlu0 %v1950
    %v1952 = vpop.xlane.xlu0 %1951
    %v1953 = vsel %vm333, %v1939, 0.0
    %1954 = vadd.xlane.f32.xlu0 %v1953
    %v1955 = vpop.xlane.xlu0 %1954
    %v1956 = vmul.f32 %v1946, %v346
    %v1957 = vmul.f32 %v1949, %v346
    %v1958 = vmul.f32 %v1952, %v346
    %v1959 = vmul.f32 %v1955, %v346
    %v1960 = vmul.f32 %v1936, %v1936
    %v1961 = vmul.f32 %v1937, %v1937
    %v1962 = vmul.f32 %v1938, %v1938
    %v1963 = vmul.f32 %v1939, %v1939
    %v1964 = vsel %vm333, %v1960, 0.0
    %1965 = vadd.xlane.f32.xlu0 %v1964
    %v1966 = vpop.xlane.xlu0 %1965
    %v1967 = vsel %vm333, %v1961, 0.0
    %1968 = vadd.xlane.f32.xlu0 %v1967
    %v1969 = vpop.xlane.xlu0 %1968
    %v1970 = vsel %vm333, %v1962, 0.0
    %1971 = vadd.xlane.f32.xlu0 %v1970
    %v1972 = vpop.xlane.xlu0 %1971
    %v1973 = vsel %vm333, %v1963, 0.0
    %1974 = vadd.xlane.f32.xlu0 %v1973
    %v1975 = vpop.xlane.xlu0 %1974
    %v1976 = vmul.f32 %v1966, %v346
    %v1977 = vmul.f32 %v1969, %v346
    %v1978 = vmul.f32 %v1972, %v346
    %v1979 = vmul.f32 %v1975, %v346
    %v1980 = vmul.f32 %v1956, %v1956
    %v1981 = vmul.f32 %v1957, %v1957
    %v1982 = vmul.f32 %v1958, %v1958
    %v1983 = vmul.f32 %v1959, %v1959
    %v1984 = vsub.f32 %v1976, %v1980
    %v1985 = vsub.f32 %v1977, %v1981
    %v1986 = vsub.f32 %v1978, %v1982
    %v1987 = vsub.f32 %v1979, %v1983
    %v1988 = vmax.f32 %v1984, 0.0
    %v1989 = vmax.f32 %v1985, 0.0
    %v1990 = vmax.f32 %v1986, 0.0
    %v1991 = vmax.f32 %v1987, 0.0
    %v1992 = vsub.f32 %v1936, %v1956
    %v1993 = vsub.f32 %v1937, %v1957
    %v1994 = vsub.f32 %v1938, %v1958
    %v1995 = vsub.f32 %v1939, %v1959
    %v1996 = vadd.f32 %v1988, 1e-05
    %v1997 = vadd.f32 %v1989, 1e-05
    %v1998 = vadd.f32 %v1990, 1e-05
    %v1999 = vadd.f32 %v1991, 1e-05
    %v2000 = vrsqrt.pop %v1996
    %v2001 = vrsqrt.pop %v1997
    %v2002 = vrsqrt.pop %v1998
    %v2003 = vrsqrt.pop %v1999
    %v2004 = vmul.f32 %v1992, %v2000
    %v2005 = vmul.f32 %v1993, %v2001
    %v2006 = vmul.f32 %v1994, %v2002
    %v2007 = vmul.f32 %v1995, %v2003
    %v2009 = vlaneseq
    %v2010 = vshrl.u32 %v2009, 7
    %v2011 = vsub.s32 0, %v2010
    %v2012 = vrot.slane %v1941, %v2011
    %v2014 = vmul.f32 %v2004, %v2012
    %v2015 = vmul.f32 %v2005, %v2012
    %v2016 = vmul.f32 %v2006, %v2012
    %v2017 = vmul.f32 %v2007, %v2012
    %v2019 = vlaneseq
    %v2020 = vshrl.u32 %v2019, 7
    %v2021 = vsub.s32 0, %v2020
    %v2022 = vrot.slane %v1943, %v2021
    %v2024 = vadd.f32 %v2014, %v2022
    %v2025 = vadd.f32 %v2015, %v2022
    %v2026 = vadd.f32 %v2016, %v2022
    %v2027 = vadd.f32 %v2017, %v2022
    %v2028 = vpack.c.bf16 %v2025, %v2024
    %v2029 = vpack.c.bf16 %v2027, %v2026
    %s2030 = scalar_lea.vmem %s15, 16
    %v2031 = vld [vmem:[%s2030] sm:$0xf]
    %v2032 = vld [vmem:[%s2030 + $0x4] sm:$0xf]
    %v2033 = vld [vmem:[%s2030 + $0x8] sm:$0xf]
    %v2034 = vld [vmem:[%s2030 + $0xc] sm:$0xf]
    %s2035 = scalar_lea.vmem %s16, 1
    %v2036 = vld [vmem:[%s2035] sm:$0x1]
    %v2038 = vlaneseq
    %v2039 = vshrl.u32 %v2038, 7
    %v2040 = vsub.s32 0, %v2039
    %v2041 = vrot.slane %v2036, %v2040
    %v2047 = vunpack.c.l.b16 %v2031
    %v2048 = vunpack.c.l.b16 %v2032
    %v2049 = vunpack.c.l.b16 %v2033
    %v2050 = vunpack.c.l.b16 %v2034
    %v2051 = vpack.c.b16 %v2048, %v2047
    %v2052 = vpack.c.b16 %v2050, %v2049
    %v2056 = vsel %vm333, %v2028, 0
    %v2059 = vsel %vm333, %v2029, 0
    %2061 = vmatprep.subr.bf16.mxu0 0
    %2062 = vmatpush1.bf16.msra.mxu0 %v2051
    %2063 = vmatprep.subr.bf16.mxu0 0
    %2064 = vmatpush1.bf16.msra.mxu0 %v2052
    %2065 = vmatprep.subr.bf16.mxu0 0
    %2066 = vmatpush1.bf16.msra.mxu0 0
    %2067 = vmatprep.subr.bf16.mxu0 0
    %2068 = vmatpush1.bf16.msra.mxu0 0
    %2069 = vmatprep.subr.bf16.mxu0 0
    %2070 = vmatpush1.bf16.msra.mxu0 0
    %2071 = vmatprep.subr.bf16.mxu0 0
    %2072 = vmatpush1.bf16.msra.mxu0 0
    %2073 = vmatprep.subr.bf16.mxu0 0
    %2074 = vmatpush1.bf16.msra.mxu0 0
    %2075 = vmatprep.subr.bf16.mxu0 0
    %2076 = vmatpush1.bf16.msra.mxu0 0
    %2077 = vmatprep.subr.bf16.mxu0 0
    %2078 = vmatpush1.bf16.msra.mxu0 0
    %2079 = vmatprep.subr.bf16.mxu0 0
    %2080 = vmatpush1.bf16.msra.mxu0 0
    %2081 = vmatprep.subr.bf16.mxu0 0
    %2082 = vmatpush1.bf16.msra.mxu0 0
    %2083 = vmatprep.subr.bf16.mxu0 0
    %2084 = vmatpush1.bf16.msra.mxu0 0
    %2085 = vmatprep.subr.bf16.mxu0 0
    %2086 = vmatpush1.bf16.msra.mxu0 0
    %2087 = vmatprep.subr.bf16.mxu0 0
    %2088 = vmatpush1.bf16.msra.mxu0 0
    %2089 = vmatprep.subr.bf16.mxu0 0
    %2090 = vmatpush1.bf16.msra.mxu0 0
    %2091 = vmatprep.subr.bf16.mxu0 0
    %2092 = vmatpush1.bf16.msra.mxu0 0
    %2093 = vmatprep.mubr.bf16.mxu0 0
    %2094 = vmatmul.mubr.bf16.gmra.mrb[0].mxu0 %v2056
    %v2095 = vpop.f32.mrb[0].mxu0
    %v2096 = vadd.f32 %v2041, %v2095
    %v2097 = vpop.f32.mrb[0].mxu0
    %v2098 = vpop.f32.mrb[0].mxu0
    %v2099 = vadd.f32 %v2041, %v2098
    %v2100 = vpop.f32.mrb[0].mxu0
    %2101 = vmatprep.mubr.bf16.mxu0 0
    %2102 = vmatmul.mubr.bf16.gmra.mrb[0].mxu0 %v2059
    %v2103 = vpop.f32.mrb[0].mxu0
    %v2104 = vadd.f32 %v2041, %v2103
    %v2105 = vpop.f32.mrb[0].mxu0
    %v2106 = vpop.f32.mrb[0].mxu0
    %v2107 = vadd.f32 %v2041, %v2106
    %v2108 = vpop.f32.mrb[0].mxu0
    %2109 = vdwg.mxu0
    %v2110 = vmax.f32 %v2096, 0.0
    %v2111 = vmax.f32 %v2099, 0.0
    %v2112 = vmax.f32 %v2104, 0.0
    %v2113 = vmax.f32 %v2107, 0.0
    %v2114 = vpack.c.bf16 %v2111, %v2110
    %v2115 = vpack.c.bf16 %v2113, %v2112
    %s2116 = scalar_lea.vmem %s17, 32
    %v2117 = vld [vmem:[%s2116] sm:$0xf]
    %v2118 = vld [vmem:[%s2116 + $0x4] sm:$0xf]
    %v2119 = vld [vmem:[%s2116 + $0x8] sm:$0xf]
    %v2120 = vld [vmem:[%s2116 + $0xc] sm:$0xf]
    %v2121 = vld [vmem:[%s2116 + $0x10] sm:$0xf]
    %v2122 = vld [vmem:[%s2116 + $0x14] sm:$0xf]
    %v2123 = vld [vmem:[%s2116 + $0x18] sm:$0xf]
    %v2124 = vld [vmem:[%s2116 + $0x1c] sm:$0xf]
    %s2125 = scalar_lea.vmem %s18, 1
    %v2126 = vld [vmem:[%s2125] sm:$0x1]
    %v2128 = vlaneseq
    %v2129 = vshrl.u32 %v2128, 7
    %v2130 = vsub.s32 0, %v2129
    %v2131 = vrot.slane %v2126, %v2130
    %v2141 = vunpack.c.l.b16 %v2117
    %v2142 = vunpack.c.l.b16 %v2118
    %v2143 = vunpack.c.l.b16 %v2119
    %v2144 = vunpack.c.l.b16 %v2120
    %v2145 = vunpack.c.l.b16 %v2121
    %v2146 = vunpack.c.l.b16 %v2122
    %v2147 = vunpack.c.l.b16 %v2123
    %v2148 = vunpack.c.l.b16 %v2124
    %v2149 = vpack.c.b16 %v2142, %v2141
    %v2150 = vpack.c.b16 %v2144, %v2143
    %v2151 = vpack.c.b16 %v2146, %v2145
    %v2152 = vpack.c.b16 %v2148, %v2147
    %v2158 = vsel %vm1277, %v2114, 0
    %v2161 = vsel %vm1277, %v2115, 0
    %2163 = vmatprep.subr.bf16.mxu0 0
    %2164 = vmatpush1.bf16.msra.mxu0 %v2149
    %2165 = vmatprep.subr.bf16.mxu0 0
    %2166 = vmatpush1.bf16.msra.mxu0 %v2150
    %2167 = vmatprep.subr.bf16.mxu0 0
    %2168 = vmatpush1.bf16.msra.mxu0 %v2151
    %2169 = vmatprep.subr.bf16.mxu0 0
    %2170 = vmatpush1.bf16.msra.mxu0 %v2152
    %2171 = vmatprep.subr.bf16.mxu0 0
    %2172 = vmatpush1.bf16.msra.mxu0 0
    %2173 = vmatprep.subr.bf16.mxu0 0
    %2174 = vmatpush1.bf16.msra.mxu0 0
    %2175 = vmatprep.subr.bf16.mxu0 0
    %2176 = vmatpush1.bf16.msra.mxu0 0
    %2177 = vmatprep.subr.bf16.mxu0 0
    %2178 = vmatpush1.bf16.msra.mxu0 0
    %2179 = vmatprep.subr.bf16.mxu0 0
    %2180 = vmatpush1.bf16.msra.mxu0 0
    %2181 = vmatprep.subr.bf16.mxu0 0
    %2182 = vmatpush1.bf16.msra.mxu0 0
    %2183 = vmatprep.subr.bf16.mxu0 0
    %2184 = vmatpush1.bf16.msra.mxu0 0
    %2185 = vmatprep.subr.bf16.mxu0 0
    %2186 = vmatpush1.bf16.msra.mxu0 0
    %2187 = vmatprep.subr.bf16.mxu0 0
    %2188 = vmatpush1.bf16.msra.mxu0 0
    %2189 = vmatprep.subr.bf16.mxu0 0
    %2190 = vmatpush1.bf16.msra.mxu0 0
    %2191 = vmatprep.subr.bf16.mxu0 0
    %2192 = vmatpush1.bf16.msra.mxu0 0
    %2193 = vmatprep.subr.bf16.mxu0 0
    %2194 = vmatpush1.bf16.msra.mxu0 0
    %2195 = vmatprep.mubr.bf16.mxu0 0
    %2196 = vmatmul.mubr.bf16.gmra.mrb[0].mxu0 %v2158
    %v2197 = vpop.f32.mrb[0].mxu0
    %v2198 = vadd.f32 %v2131, %v2197
    %v2199 = vpop.f32.mrb[0].mxu0
    %v2200 = vpop.f32.mrb[0].mxu0
    %v2201 = vadd.f32 %v2131, %v2200
    %v2202 = vpop.f32.mrb[0].mxu0
    %2203 = vmatprep.mubr.bf16.mxu0 0
    %2204 = vmatmul.mubr.bf16.gmra.mrb[0].mxu0 %v2161
    %v2205 = vpop.f32.mrb[0].mxu0
    %v2206 = vadd.f32 %v2131, %v2205
    %v2207 = vpop.f32.mrb[0].mxu0
    %v2208 = vpop.f32.mrb[0].mxu0
    %v2209 = vadd.f32 %v2131, %v2208
    %v2210 = vpop.f32.mrb[0].mxu0
    %2211 = vdwg.mxu0
    %v2212 = vadd.f32 %v2024, %v2198
    %v2213 = vadd.f32 %v2025, %v2201
    %v2214 = vadd.f32 %v2026, %v2206
    %v2215 = vadd.f32 %v2027, %v2209
    %s2216 = scalar_lea.vmem %s19, 1
    %v2217 = vld [vmem:[%s2216] sm:$0x1]
    %s2218 = scalar_lea.vmem %s20, 1
    %v2219 = vld [vmem:[%s2218] sm:$0x1]
    %v2220 = vsel %vm333, %v2212, 0.0
    %2221 = vadd.xlane.f32.xlu0 %v2220
    %v2222 = vpop.xlane.xlu0 %2221
    %v2223 = vsel %vm333, %v2213, 0.0
    %2224 = vadd.xlane.f32.xlu0 %v2223
    %v2225 = vpop.xlane.xlu0 %2224
    %v2226 = vsel %vm333, %v2214, 0.0
    %2227 = vadd.xlane.f32.xlu0 %v2226
    %v2228 = vpop.xlane.xlu0 %2227
    %v2229 = vsel %vm333, %v2215, 0.0
    %2230 = vadd.xlane.f32.xlu0 %v2229
    %v2231 = vpop.xlane.xlu0 %2230
    %v2232 = vmul.f32 %v2222, %v346
    %v2233 = vmul.f32 %v2225, %v346
    %v2234 = vmul.f32 %v2228, %v346
    %v2235 = vmul.f32 %v2231, %v346
    %v2236 = vmul.f32 %v2212, %v2212
    %v2237 = vmul.f32 %v2213, %v2213
    %v2238 = vmul.f32 %v2214, %v2214
    %v2239 = vmul.f32 %v2215, %v2215
    %v2240 = vsel %vm333, %v2236, 0.0
    %2241 = vadd.xlane.f32.xlu0 %v2240
    %v2242 = vpop.xlane.xlu0 %2241
    %v2243 = vsel %vm333, %v2237, 0.0
    %2244 = vadd.xlane.f32.xlu0 %v2243
    %v2245 = vpop.xlane.xlu0 %2244
    %v2246 = vsel %vm333, %v2238, 0.0
    %2247 = vadd.xlane.f32.xlu0 %v2246
    %v2248 = vpop.xlane.xlu0 %2247
    %v2249 = vsel %vm333, %v2239, 0.0
    %2250 = vadd.xlane.f32.xlu0 %v2249
    %v2251 = vpop.xlane.xlu0 %2250
    %v2252 = vmul.f32 %v2242, %v346
    %v2253 = vmul.f32 %v2245, %v346
    %v2254 = vmul.f32 %v2248, %v346
    %v2255 = vmul.f32 %v2251, %v346
    %v2256 = vmul.f32 %v2232, %v2232
    %v2257 = vmul.f32 %v2233, %v2233
    %v2258 = vmul.f32 %v2234, %v2234
    %v2259 = vmul.f32 %v2235, %v2235
    %v2260 = vsub.f32 %v2252, %v2256
    %v2261 = vsub.f32 %v2253, %v2257
    %v2262 = vsub.f32 %v2254, %v2258
    %v2263 = vsub.f32 %v2255, %v2259
    %v2264 = vmax.f32 %v2260, 0.0
    %v2265 = vmax.f32 %v2261, 0.0
    %v2266 = vmax.f32 %v2262, 0.0
    %v2267 = vmax.f32 %v2263, 0.0
    %v2268 = vsub.f32 %v2212, %v2232
    %v2269 = vsub.f32 %v2213, %v2233
    %v2270 = vsub.f32 %v2214, %v2234
    %v2271 = vsub.f32 %v2215, %v2235
    %v2272 = vadd.f32 %v2264, 1e-05
    %v2273 = vadd.f32 %v2265, 1e-05
    %v2274 = vadd.f32 %v2266, 1e-05
    %v2275 = vadd.f32 %v2267, 1e-05
    %v2276 = vrsqrt.pop %v2272
    %v2277 = vrsqrt.pop %v2273
    %v2278 = vrsqrt.pop %v2274
    %v2279 = vrsqrt.pop %v2275
    %v2280 = vmul.f32 %v2268, %v2276
    %v2281 = vmul.f32 %v2269, %v2277
    %v2282 = vmul.f32 %v2270, %v2278
    %v2283 = vmul.f32 %v2271, %v2279
    %v2285 = vlaneseq
    %v2286 = vshrl.u32 %v2285, 7
    %v2287 = vsub.s32 0, %v2286
    %v2288 = vrot.slane %v2217, %v2287
    %v2290 = vmul.f32 %v2280, %v2288
    %v2291 = vmul.f32 %v2281, %v2288
    %v2292 = vmul.f32 %v2282, %v2288
    %v2293 = vmul.f32 %v2283, %v2288
    %v2295 = vlaneseq
    %v2296 = vshrl.u32 %v2295, 7
    %v2297 = vsub.s32 0, %v2296
    %v2298 = vrot.slane %v2219, %v2297
    %v2300 = vadd.f32 %v2290, %v2298
    %v2301 = vadd.f32 %v2291, %v2298
    %v2302 = vadd.f32 %v2292, %v2298
    %v2303 = vadd.f32 %v2293, %v2298
    %2304 = vst.msk [vmem:[#allocation2] sm:$0xff] %vm333, %v2300
    %2305 = vst.msk [vmem:[#allocation2 + $0x8] sm:$0xff] %vm333, %v2301
    %2306 = vst.msk [vmem:[#allocation2 + $0x10] sm:$0xff] %vm333, %v2302
    %2307 = vst.msk [vmem:[#allocation2 + $0x18] sm:$0xff] %vm333, %v2303
    // Predicated region
    $region86: #{transformer_encoder.1} parent=1 // pred_check
      _
    $region87: #{transformer_encoder.1} parent=1 // pred_check_branch
      %2309 = sbr.rel (0) target = $region89
    $region88: #{transformer_encoder.1} parent=1 // pred_region
      %s2311 = ssub.s32 512, 512
      %2312 = vsyncadd [#allocation3], %s2311
      %s2313 = sshll.u32 [#allocation2], 4
      %s2314 = int_to_ptr.vmem [resolvable:$true] %s2313
      %2319 = dma.vmem_to_hbm [thread:$0]  %s2314, 512, %s21, [#allocation3], 128, 128, 8
    $region89: #{transformer_encoder.1} parent=1 // pred_fallthru
      _
    // Predicated region
    $region90: #{transformer_encoder.1} parent=1 // pred_check
      _
    $region91: #{transformer_encoder.1} parent=1 // pred_check_branch
      %2321 = sbr.rel (0) target = $region93
    $region92: #{transformer_encoder.1} parent=1 // pred_region
      %2322 = dma.done [#allocation3], 512
    $region93: #{transformer_encoder.1} parent=1 // pred_fallthru
      _
    %2323 = vsyncpa [#allocation3], 1

</llo_original>
